<compile_context>
chip_gen: v7x
topology: tpu7x:2x2x1
jax: 0.10.0
libtpu: 0.0.40
codegen_flags: <defaults>
</compile_context>

<pallas_src>
import functools
import math

import jax
import jax.numpy as jnp
from jax import lax
from jax.experimental import pallas as pl
from jax.experimental.pallas import tpu as pltpu


def _round_up(n, m):
    return ((n + m - 1) // m) * m


def _cdiv(a, b):
    return (a + b - 1) // b


# ---------------------------------------------------------------------------
# Kernel 1: the serial recurrence.  grid = (batch_tiles, time_chunks).
# ---------------------------------------------------------------------------
def rnn_recurrence_kernel(x_ref, h0_ref, wih_ref, whh_ref, bh_ref,
                          h_seq_ref, hfin_ref, h_scr, px_scr, *, seq_len):
    """One grid step == one chunk of `tc` timesteps for one batch tile.

    x_ref    : [tc, tb, Ip]   input chunk (compute dtype, e.g. bf16)
    h0_ref   : [tb, Hp] f32   initial hidden, read only at chunk 0
    wih_ref  : [Ip, Hp]       resident i2h weight (compute dtype)
    whh_ref  : [Hp, Hp]       resident h2h weight (compute dtype)
    bh_ref   : [1, Hp]  f32   fused bias (bih + bhh)
    h_seq_ref: [tc, tb, Hp]   per-step hidden states (feeds the h2o GEMM)
    hfin_ref : [tb, Hp] f32   final hidden, written on the last chunk
    h_scr    : VMEM [tb, Hp] f32       carried hidden state
    px_scr   : VMEM [tc, tb, Hp] f32   i2h projection of the chunk
    """
    c = pl.program_id(1)
    tc, tb, ip = x_ref.shape
    hp = h_scr.shape[-1]

    @pl.when(c == 0)
    def _():
        h_scr[...] = h0_ref[...]

    # ---- non-recurrent i2h for the whole chunk: one big-M MXU GEMM. ----
    x2d = x_ref[...].reshape(tc * tb, ip)
    px = jnp.dot(x2d, wih_ref[...], preferred_element_type=jnp.float32)
    px_scr[...] = px.reshape(tc, tb, hp)

    # Hoisted out of the serial loop (broadcast_in_dim is not CSE'd by JAX).
    bh = jnp.broadcast_to(bh_ref[...], (tb, hp))
    whh = whh_ref[...]

    def step(i, h):
        ph = jnp.dot(h.astype(whh.dtype), whh,
                     preferred_element_type=jnp.float32)
        h_new = jnp.tanh(px_scr[i] + ph + bh)
        h_seq_ref[i] = h_new.astype(h_seq_ref.dtype)
        # Freeze the carried state on padded tail timesteps (t >= seq_len).
        t = c * tc + i
        return jnp.where(t < seq_len, h_new, h)

    h_last = lax.fori_loop(0, tc, step, h_scr[...], unroll=True)
    h_scr[...] = h_last

    @pl.when(c == pl.num_programs(1) - 1)
    def _():
        hfin_ref[...] = h_last


# ---------------------------------------------------------------------------
# Kernel 2: h2o projection as one large GEMM over all (t, b) rows.
# ---------------------------------------------------------------------------
def h2o_kernel(h_ref, who_ref, bho_ref, out_ref):
    acc = jnp.dot(h_ref[...], who_ref[...], preferred_element_type=jnp.float32)
    out_ref[...] = (acc + bho_ref[...]).astype(out_ref.dtype)


# ---------------------------------------------------------------------------
# Parameters
# ---------------------------------------------------------------------------
def init_params(key, input_size, hidden_size, output_size, dtype=jnp.float32):
    """nn.Linear-style init; weights stored transposed as [in, out]."""
    keys = jax.random.split(key, 6)

    def linear(kw, kb, fan_in, fan_out):
        bound = 1.0 / math.sqrt(fan_in)
        w = jax.random.uniform(kw, (fan_in, fan_out), dtype, -bound, bound)
        b = jax.random.uniform(kb, (1, fan_out), dtype, -bound, bound)
        return w, b

    wih, bih = linear(keys[0], keys[1], input_size, hidden_size)
    whh, bhh = linear(keys[2], keys[3], hidden_size, hidden_size)
    who, bho = linear(keys[4], keys[5], hidden_size, output_size)
    return (wih, bih, whh, bhh, who, bho)


def prepare_params(raw_params, input_size, hidden_size, output_size,
                   compute_dtype=jnp.bfloat16):
    """Pad lane dims to 128, fuse bih+bhh, cast matmul weights to bf16.

    Padded rows/cols are exact zeros, so padded hidden/output columns stay
    zero through the recurrence and never contaminate real columns.
    """
    wih, bih, whh, bhh, who, bho = raw_params
    ip = _round_up(input_size, 128)
    hp = _round_up(hidden_size, 128)
    op = _round_up(output_size, 128)

    wih_p = (jnp.zeros((ip, hp), compute_dtype)
             .at[:input_size, :hidden_size].set(wih.astype(compute_dtype)))
    whh_p = (jnp.zeros((hp, hp), compute_dtype)
             .at[:hidden_size, :hidden_size].set(whh.astype(compute_dtype)))
    bh = (jnp.zeros((1, hp), jnp.float32)
          .at[:, :hidden_size].set((bih + bhh).astype(jnp.float32)))
    who_p = (jnp.zeros((hp, op), compute_dtype)
             .at[:hidden_size, :output_size].set(who.astype(compute_dtype)))
    bho_p = (jnp.zeros((1, op), jnp.float32)
             .at[:, :output_size].set(bho.astype(jnp.float32)))
    return wih_p, whh_p, bh, who_p, bho_p


# ---------------------------------------------------------------------------
# Wrappers
# ---------------------------------------------------------------------------
def rnn_forward(xs, h0, wih_p, whh_p, bh, who_p, bho_p, *,
                hidden_size, output_size,
                time_chunk=32, batch_tile=None, out_row_tile=512):
    """Run the RNN over a whole sequence.

    xs : [T, B, input_size], h0 : [B, hidden_size]
    Returns (outputs [T, B, output_size], final_hidden [B, hidden_size]).
    Each step matches the PyTorch module's forward().
    batch_tile=None keeps the whole (padded) batch on one core; on v7x set it
    to padded_batch // 2 so the "parallel" batch axis uses both TensorCores.
    """
    T, B, _ = xs.shape
    ip, hp = wih_p.shape
    op = who_p.shape[1]
    cdt = wih_p.dtype
    # Sub-32-bit dtypes pack along sublanes -> 16-row tiles for bf16, 8 for f32.
    sub = 8 * (4 // jnp.dtype(cdt).itemsize)

    bp = max(_round_up(B, sub), sub)
    tb = bp if batch_tile is None else max(_round_up(batch_tile, sub), sub)
    bp = _round_up(bp, tb)
    nb = bp // tb

    tc = max(1, min(time_chunk, T))
    n_chunks = _cdiv(T, tc)
    tpad = n_chunks * tc

    # NOTE: padded batch rows evolve as tanh(bias + ...) != 0; batch rows are
    # independent and sliced off below, so this is harmless (do not reduce
    # over the padded batch axis inside the kernel).
    xs_p = jnp.zeros((tpad, bp, ip), cdt).at[:T, :B, :xs.shape[2]].set(
        xs.astype(cdt))
    h0_p = (jnp.zeros((bp, hp), jnp.float32)
            .at[:B, :hidden_size].set(h0.astype(jnp.float32)))

    kernel = functools.partial(rnn_recurrence_kernel, seq_len=T)

    h_seq, hfin = pl.pallas_call(
        kernel,
        out_shape=(jax.ShapeDtypeStruct((tpad, bp, hp), cdt),
                   jax.ShapeDtypeStruct((bp, hp), jnp.float32)),
        grid=(nb, n_chunks),
        in_specs=[
            pl.BlockSpec((tc, tb, ip), lambda b, c: (c, b, 0)),   # x chunk
            pl.BlockSpec((tb, hp), lambda b, c: (b, 0)),          # h0
            pl.BlockSpec((ip, hp), lambda b, c: (0, 0)),          # wih (resident)
            pl.BlockSpec((hp, hp), lambda b, c: (0, 0)),          # whh (resident)
            pl.BlockSpec((1, hp), lambda b, c: (0, 0)),           # bih + bhh
        ],
        out_specs=(
            pl.BlockSpec((tc, tb, hp), lambda b, c: (c, b, 0)),   # hidden seq
            pl.BlockSpec((tb, hp), lambda b, c: (b, 0)),          # final hidden
        ),
        scratch_shapes=[
            pltpu.VMEM((tb, hp), jnp.float32),          # carried hidden state
            pltpu.VMEM((tc, tb, hp), jnp.float32),      # i2h chunk projection
        ],
        compiler_params=pltpu.CompilerParams(
            dimension_semantics=("parallel", "arbitrary"),
            vmem_limit_bytes=64 * 1024 * 1024),
    )(xs_p, h0_p, wih_p, whh_p, bh)

    # ---- h2o: one big-M GEMM over all (t, b) rows, off the serial path. ----
    rows = tpad * bp
    tm = min(rows, max(_round_up(out_row_tile, sub), sub))
    rows_p = _round_up(rows, tm)
    h2d = h_seq.reshape(rows, hp)
    if rows_p != rows:
        h2d = jnp.zeros((rows_p, hp), h2d.dtype).at[:rows].set(h2d)

    outs2d = pl.pallas_call(
        h2o_kernel,
        out_shape=jax.ShapeDtypeStruct((rows_p, op), xs.dtype),
        grid=(rows_p // tm,),
        in_specs=[pl.BlockSpec((tm, hp), lambda m: (m, 0)),
                  pl.BlockSpec((hp, op), lambda m: (0, 0)),
                  pl.BlockSpec((1, op), lambda m: (0, 0))],
        out_specs=pl.BlockSpec((tm, op), lambda m: (m, 0)),
        compiler_params=pltpu.CompilerParams(
            dimension_semantics=("parallel",),
            vmem_limit_bytes=64 * 1024 * 1024),
    )(h2d, who_p, bho_p)

    outs = outs2d[:rows].reshape(tpad, bp, op)[:T, :B, :output_size]
    h_final = hfin[:B, :hidden_size].astype(h0.dtype)
    return outs, h_final


def rnn_cell(x, h, wih_p, whh_p, bh, who_p, bho_p, *, hidden_size, output_size):
    """Single step; semantics identical to the PyTorch module's forward()."""
    outs, h_new = rnn_forward(x[None], h, wih_p, whh_p, bh, who_p, bho_p,
                              hidden_size=hidden_size, output_size=output_size)
    return outs[0], h_new


# ---------------------------------------------------------------------------
# Pure-JAX references
# ---------------------------------------------------------------------------
def reference_step(x, h, raw_params):
    wih, bih, whh, bhh, who, bho = raw_params
    h_new = jnp.tanh(x @ wih + bih + h @ whh + bhh)
    out = h_new @ who + bho
    return out, h_new


def reference_seq(xs, h0, raw_params):
    def step(h, x):
        out, h_new = reference_step(x, h, raw_params)
        return h_new, out
    h_final, outs = jax.lax.scan(step, h0, xs)
    return outs, h_final


def reference_seq_mxu(xs, h0, raw_params, compute_dtype=jnp.bfloat16):
    """Same math as the Pallas path: bf16 MXU inputs, f32 accum / state."""
    wih, bih, whh, bhh, who, bho = raw_params
    c = lambda a: a.astype(compute_dtype)
    bh = (bih + bhh).astype(jnp.float32)

    def step(h, x):
        pre = (jnp.dot(c(x), c(wih), preferred_element_type=jnp.float32)
               + jnp.dot(c(h), c(whh), preferred_element_type=jnp.float32)
               + bh)
        h_new = jnp.tanh(pre)
        out = (jnp.dot(c(h_new), c(who), preferred_element_type=jnp.float32)
               + bho.astype(jnp.float32))
        return h_new, out

    h_final, outs = jax.lax.scan(step, h0.astype(jnp.float32), xs)
    return outs, h_final


# ---------------------------------------------------------------------------
if __name__ == "__main__":
    input_size, hidden_size, output_size = 16, 32, 8
    batch, seq_len = 2, 8

    key = jax.random.PRNGKey(0)
    k_params, k_x, k_h = jax.random.split(key, 3)

    raw = init_params(k_params, input_size, hidden_size, output_size)
    xs = jax.random.normal(k_x, (seq_len, batch, input_size), jnp.float32)
    h0 = jax.random.normal(k_h, (batch, hidden_size), jnp.float32)

    ref_outs, ref_hfin = reference_seq(xs, h0, raw)

    # ---- f32 MXU path: matches the PyTorch/f32 semantics tightly. ----------
    fused32 = prepare_params(raw, input_size, hidden_size, output_size,
                             compute_dtype=jnp.float32)
    fwd = jax.jit(functools.partial(rnn_forward, hidden_size=hidden_size,
                                    output_size=output_size))
    outs32, hfin32 = fwd(xs, h0, *fused32)
    jax.block_until_ready((outs32, hfin32))
    assert outs32.shape == (seq_len, batch, output_size)
    assert hfin32.shape == (batch, hidden_size)
    assert jnp.allclose(outs32, ref_outs, atol=5e-5, rtol=5e-5)
    assert jnp.allclose(hfin32, ref_hfin, atol=5e-5, rtol=5e-5)

    # ---- bf16 MXU path (fast path per perf review). -------------------------
    fused16 = prepare_params(raw, input_size, hidden_size, output_size,
                             compute_dtype=jnp.bfloat16)
    outs16, hfin16 = fwd(xs, h0, *fused16)
    jax.block_until_ready((outs16, hfin16))
    emu_outs, emu_hfin = reference_seq_mxu(xs, h0, raw, jnp.bfloat16)
    assert jnp.allclose(outs16, emu_outs, atol=5e-3, rtol=5e-3)
    assert jnp.allclose(hfin16, emu_hfin, atol=5e-3, rtol=5e-3)
    # Looser vs the f32 reference: bf16 error accumulates through the recurrence.
    assert jnp.allclose(outs16, ref_outs, atol=1e-1, rtol=1e-1)
    assert jnp.allclose(hfin16, ref_hfin, atol=1e-1, rtol=1e-1)

    # ---- single-step path (the PyTorch forward(input, hidden) signature). ---
    cell = jax.jit(functools.partial(rnn_cell, hidden_size=hidden_size,
                                     output_size=output_size))
    out1, h1 = cell(xs[0], h0, *fused32)
    jax.block_until_ready((out1, h1))
    ref_out1, ref_h1 = reference_step(xs[0], h0, raw)
    assert jnp.allclose(out1, ref_out1, atol=5e-5, rtol=5e-5)
    assert jnp.allclose(h1, ref_h1, atol=5e-5, rtol=5e-5)

    print("KERNEL_OK")
</pallas_src>

<mosaic_0001>
module attributes {stable_mosaic.version = 11 : i64} {
  func.func @rnn_recurrence_kernel(%arg0: i32, %arg1: i32, %arg2: memref<8x8x128xf32, #tpu.memory_space<vmem>>, %arg3: memref<8x128xf32, #tpu.memory_space<vmem>>, %arg4: memref<128x128xf32, #tpu.memory_space<vmem>>, %arg5: memref<128x128xf32, #tpu.memory_space<vmem>>, %arg6: memref<1x128xf32, #tpu.memory_space<vmem>>, %arg7: memref<8x8x128xf32, #tpu.memory_space<vmem>>, %arg8: memref<8x128xf32, #tpu.memory_space<vmem>>, %arg9: memref<8x128xf32, #tpu.memory_space<vmem>>, %arg10: memref<8x8x128xf32, #tpu.memory_space<vmem>>) attributes {dimension_semantics = [#tpu.dimension_semantics<parallel>, #tpu.dimension_semantics<arbitrary>], iteration_bounds = array<i64: 1, 1>, scalar_prefetch = 0 : i64, scratch_operands = 2 : i64, tpu.core_type = #tpu.core_type<tc>, window_params = [{transform_indices = @transform_0, window_bounds = array<i64: 8, 8, 128>}, {transform_indices = @transform_1, window_bounds = array<i64: 8, 128>}, {pipeline_mode = #tpu.pipeline_mode<synchronous>, transform_indices = @transform_2, window_bounds = array<i64: 128, 128>}, {pipeline_mode = #tpu.pipeline_mode<synchronous>, transform_indices = @transform_3, window_bounds = array<i64: 128, 128>}, {pipeline_mode = #tpu.pipeline_mode<synchronous>, transform_indices = @transform_4, window_bounds = array<i64: 1, 128>}, {transform_indices = @transform_5, window_bounds = array<i64: 8, 8, 128>}, {transform_indices = @transform_6, window_bounds = array<i64: 8, 128>}]} {
    %c0_i32 = arith.constant 0 : i32
    %0 = arith.cmpi eq, %arg1, %c0_i32 : i32
    %1 = arith.extui %0 : i1 to i32
    %c0_i32_0 = arith.constant 0 : i32
    %2 = arith.cmpi ne, %1, %c0_i32_0 : i32
    scf.if %2 {
      %c0_75 = arith.constant 0 : index
      %c0_76 = arith.constant 0 : index
      %138 = vector.load %arg3[%c0_75, %c0_76] : memref<8x128xf32, #tpu.memory_space<vmem>>, vector<8x128xf32>
      %c0_77 = arith.constant 0 : index
      %c0_78 = arith.constant 0 : index
      %139 = vector.load %arg9[%c0_77, %c0_78] : memref<8x128xf32, #tpu.memory_space<vmem>>, vector<8x128xf32>
      tpu.vector_store %arg9[%c0_77, %c0_78], %138 {strides = array<i32>} : memref<8x128xf32, #tpu.memory_space<vmem>>, vector<8x128xf32>,
    } else {
    }
    %c0 = arith.constant 0 : index
    %c0_1 = arith.constant 0 : index
    %c0_2 = arith.constant 0 : index
    %3 = vector.load %arg2[%c0, %c0_1, %c0_2] : memref<8x8x128xf32, #tpu.memory_space<vmem>>, vector<8x8x128xf32>
    %4 = vector.shape_cast %3 : vector<8x8x128xf32> to vector<64x128xf32>
    %c0_3 = arith.constant 0 : index
    %c0_4 = arith.constant 0 : index
    %5 = vector.load %arg4[%c0_3, %c0_4] : memref<128x128xf32, #tpu.memory_space<vmem>>, vector<128x128xf32>
    %cst = arith.constant dense<0.000000e+00> : vector<64x128xf32>
    %6 = tpu.matmul %4, %5, %cst {dimension_numbers = #tpu.dot_dimension_numbers<[1], [0], [0], [1], [0, 0, 1, 1], [], []>} : vector<64x128xf32>, vector<128x128xf32>, vector<64x128xf32> -> vector<64x128xf32>
    %7 = vector.shape_cast %6 : vector<64x128xf32> to vector<8x8x128xf32>
    %c0_5 = arith.constant 0 : index
    %c0_6 = arith.constant 0 : index
    %c0_7 = arith.constant 0 : index
    %8 = vector.load %arg10[%c0_5, %c0_6, %c0_7] : memref<8x8x128xf32, #tpu.memory_space<vmem>>, vector<8x8x128xf32>
    tpu.vector_store %arg10[%c0_5, %c0_6, %c0_7], %7 {strides = array<i32>} : memref<8x8x128xf32, #tpu.memory_space<vmem>>, vector<8x8x128xf32>,
    %c0_8 = arith.constant 0 : index
    %c0_9 = arith.constant 0 : index
    %9 = vector.load %arg6[%c0_8, %c0_9] : memref<1x128xf32, #tpu.memory_space<vmem>>, vector<1x128xf32>
    %10 = vector.shape_cast %9 : vector<1x128xf32> to vector<1x128xf32>
    %11 = vector.broadcast %10 : vector<1x128xf32> to vector<8x128xf32>
    %c0_10 = arith.constant 0 : index
    %c0_11 = arith.constant 0 : index
    %12 = vector.load %arg5[%c0_10, %c0_11] : memref<128x128xf32, #tpu.memory_space<vmem>>, vector<128x128xf32>
    %c0_12 = arith.constant 0 : index
    %c0_13 = arith.constant 0 : index
    %13 = vector.load %arg9[%c0_12, %c0_13] : memref<8x128xf32, #tpu.memory_space<vmem>>, vector<8x128xf32>
    %c0_i32_14 = arith.constant 0 : i32
    %cst_15 = arith.constant dense<0.000000e+00> : vector<8x128xf32>
    %14 = tpu.matmul %13, %12, %cst_15 {dimension_numbers = #tpu.dot_dimension_numbers<[1], [0], [0], [1], [0, 0, 1, 1], [], []>} : vector<8x128xf32>, vector<128x128xf32>, vector<8x128xf32> -> vector<8x128xf32>
    %15 = arith.index_cast %c0_i32_14 : i32 to index
    %c0_16 = arith.constant 0 : index
    %c0_17 = arith.constant 0 : index
    %16 = vector.load %arg10[%15, %c0_16, %c0_17] : memref<8x8x128xf32, #tpu.memory_space<vmem>>, vector<1x8x128xf32>
    %17 = vector.shape_cast %16 : vector<1x8x128xf32> to vector<8x128xf32>
    %18 = arith.addf %17, %14 : vector<8x128xf32>
    %19 = arith.addf %18, %11 : vector<8x128xf32>
    %20 = math.tanh %19 : vector<8x128xf32>
    %21 = arith.index_cast %c0_i32_14 : i32 to index
    %c0_18 = arith.constant 0 : index
    %c0_19 = arith.constant 0 : index
    %22 = vector.load %arg7[%21, %c0_18, %c0_19] : memref<8x8x128xf32, #tpu.memory_space<vmem>>, vector<1x8x128xf32>
    %23 = vector.shape_cast %22 : vector<1x8x128xf32> to vector<8x128xf32>
    %24 = vector.shape_cast %20 : vector<8x128xf32> to vector<1x8x128xf32>
    tpu.vector_store %arg7[%21, %c0_18, %c0_19], %24 {strides = array<i32>} : memref<8x8x128xf32, #tpu.memory_space<vmem>>, vector<1x8x128xf32>,
    %c8_i32 = arith.constant 8 : i32
    %25 = arith.muli %arg1, %c8_i32 : i32
    %26 = arith.addi %25, %c0_i32_14 : i32
    %c8_i32_20 = arith.constant 8 : i32
    %27 = arith.cmpi slt, %26, %c8_i32_20 : i32
    %28 = arith.select %27, %20, %13 : vector<8x128xf32>
    %c1_i32 = arith.constant 1 : i32
    %cst_21 = arith.constant dense<0.000000e+00> : vector<8x128xf32>
    %29 = tpu.matmul %28, %12, %cst_21 {dimension_numbers = #tpu.dot_dimension_numbers<[1], [0], [0], [1], [0, 0, 1, 1], [], []>} : vector<8x128xf32>, vector<128x128xf32>, vector<8x128xf32> -> vector<8x128xf32>
    %30 = arith.index_cast %c1_i32 : i32 to index
    %c0_22 = arith.constant 0 : index
    %c0_23 = arith.constant 0 : index
    %31 = vector.load %arg10[%30, %c0_22, %c0_23] : memref<8x8x128xf32, #tpu.memory_space<vmem>>, vector<1x8x128xf32>
    %32 = vector.shape_cast %31 : vector<1x8x128xf32> to vector<8x128xf32>
    %33 = arith.addf %32, %29 : vector<8x128xf32>
    %34 = arith.addf %33, %11 : vector<8x128xf32>
    %35 = math.tanh %34 : vector<8x128xf32>
    %36 = arith.index_cast %c1_i32 : i32 to index
    %c0_24 = arith.constant 0 : index
    %c0_25 = arith.constant 0 : index
    %37 = vector.load %arg7[%36, %c0_24, %c0_25] : memref<8x8x128xf32, #tpu.memory_space<vmem>>, vector<1x8x128xf32>
    %38 = vector.shape_cast %37 : vector<1x8x128xf32> to vector<8x128xf32>
    %39 = vector.shape_cast %35 : vector<8x128xf32> to vector<1x8x128xf32>
    tpu.vector_store %arg7[%36, %c0_24, %c0_25], %39 {strides = array<i32>} : memref<8x8x128xf32, #tpu.memory_space<vmem>>, vector<1x8x128xf32>,
    %c8_i32_26 = arith.constant 8 : i32
    %40 = arith.muli %arg1, %c8_i32_26 : i32
    %41 = arith.addi %40, %c1_i32 : i32
    %c8_i32_27 = arith.constant 8 : i32
    %42 = arith.cmpi slt, %41, %c8_i32_27 : i32
    %43 = arith.select %42, %35, %28 : vector<8x128xf32>
    %c2_i32 = arith.constant 2 : i32
    %cst_28 = arith.constant dense<0.000000e+00> : vector<8x128xf32>
    %44 = tpu.matmul %43, %12, %cst_28 {dimension_numbers = #tpu.dot_dimension_numbers<[1], [0], [0], [1], [0, 0, 1, 1], [], []>} : vector<8x128xf32>, vector<128x128xf32>, vector<8x128xf32> -> vector<8x128xf32>
    %45 = arith.index_cast %c2_i32 : i32 to index
    %c0_29 = arith.constant 0 : index
    %c0_30 = arith.constant 0 : index
    %46 = vector.load %arg10[%45, %c0_29, %c0_30] : memref<8x8x128xf32, #tpu.memory_space<vmem>>, vector<1x8x128xf32>
    %47 = vector.shape_cast %46 : vector<1x8x128xf32> to vector<8x128xf32>
    %48 = arith.addf %47, %44 : vector<8x128xf32>
    %49 = arith.addf %48, %11 : vector<8x128xf32>
    %50 = math.tanh %49 : vector<8x128xf32>
    %51 = arith.index_cast %c2_i32 : i32 to index
    %c0_31 = arith.constant 0 : index
    %c0_32 = arith.constant 0 : index
    %52 = vector.load %arg7[%51, %c0_31, %c0_32] : memref<8x8x128xf32, #tpu.memory_space<vmem>>, vector<1x8x128xf32>
    %53 = vector.shape_cast %52 : vector<1x8x128xf32> to vector<8x128xf32>
    %54 = vector.shape_cast %50 : vector<8x128xf32> to vector<1x8x128xf32>
    tpu.vector_store %arg7[%51, %c0_31, %c0_32], %54 {strides = array<i32>} : memref<8x8x128xf32, #tpu.memory_space<vmem>>, vector<1x8x128xf32>,
    %c8_i32_33 = arith.constant 8 : i32
    %55 = arith.muli %arg1, %c8_i32_33 : i32
    %56 = arith.addi %55, %c2_i32 : i32
    %c8_i32_34 = arith.constant 8 : i32
    %57 = arith.cmpi slt, %56, %c8_i32_34 : i32
    %58 = arith.select %57, %50, %43 : vector<8x128xf32>
    %c3_i32 = arith.constant 3 : i32
    %cst_35 = arith.constant dense<0.000000e+00> : vector<8x128xf32>
    %59 = tpu.matmul %58, %12, %cst_35 {dimension_numbers = #tpu.dot_dimension_numbers<[1], [0], [0], [1], [0, 0, 1, 1], [], []>} : vector<8x128xf32>, vector<128x128xf32>, vector<8x128xf32> -> vector<8x128xf32>
    %60 = arith.index_cast %c3_i32 : i32 to index
    %c0_36 = arith.constant 0 : index
    %c0_37 = arith.constant 0 : index
    %61 = vector.load %arg10[%60, %c0_36, %c0_37] : memref<8x8x128xf32, #tpu.memory_space<vmem>>, vector<1x8x128xf32>
    %62 = vector.shape_cast %61 : vector<1x8x128xf32> to vector<8x128xf32>
    %63 = arith.addf %62, %59 : vector<8x128xf32>
    %64 = arith.addf %63, %11 : vector<8x128xf32>
    %65 = math.tanh %64 : vector<8x128xf32>
    %66 = arith.index_cast %c3_i32 : i32 to index
    %c0_38 = arith.constant 0 : index
    %c0_39 = arith.constant 0 : index
    %67 = vector.load %arg7[%66, %c0_38, %c0_39] : memref<8x8x128xf32, #tpu.memory_space<vmem>>, vector<1x8x128xf32>
    %68 = vector.shape_cast %67 : vector<1x8x128xf32> to vector<8x128xf32>
    %69 = vector.shape_cast %65 : vector<8x128xf32> to vector<1x8x128xf32>
    tpu.vector_store %arg7[%66, %c0_38, %c0_39], %69 {strides = array<i32>} : memref<8x8x128xf32, #tpu.memory_space<vmem>>, vector<1x8x128xf32>,
    %c8_i32_40 = arith.constant 8 : i32
    %70 = arith.muli %arg1, %c8_i32_40 : i32
    %71 = arith.addi %70, %c3_i32 : i32
    %c8_i32_41 = arith.constant 8 : i32
    %72 = arith.cmpi slt, %71, %c8_i32_41 : i32
    %73 = arith.select %72, %65, %58 : vector<8x128xf32>
    %c4_i32 = arith.constant 4 : i32
    %cst_42 = arith.constant dense<0.000000e+00> : vector<8x128xf32>
    %74 = tpu.matmul %73, %12, %cst_42 {dimension_numbers = #tpu.dot_dimension_numbers<[1], [0], [0], [1], [0, 0, 1, 1], [], []>} : vector<8x128xf32>, vector<128x128xf32>, vector<8x128xf32> -> vector<8x128xf32>
    %75 = arith.index_cast %c4_i32 : i32 to index
    %c0_43 = arith.constant 0 : index
    %c0_44 = arith.constant 0 : index
    %76 = vector.load %arg10[%75, %c0_43, %c0_44] : memref<8x8x128xf32, #tpu.memory_space<vmem>>, vector<1x8x128xf32>
    %77 = vector.shape_cast %76 : vector<1x8x128xf32> to vector<8x128xf32>
    %78 = arith.addf %77, %74 : vector<8x128xf32>
    %79 = arith.addf %78, %11 : vector<8x128xf32>
    %80 = math.tanh %79 : vector<8x128xf32>
    %81 = arith.index_cast %c4_i32 : i32 to index
    %c0_45 = arith.constant 0 : index
    %c0_46 = arith.constant 0 : index
    %82 = vector.load %arg7[%81, %c0_45, %c0_46] : memref<8x8x128xf32, #tpu.memory_space<vmem>>, vector<1x8x128xf32>
    %83 = vector.shape_cast %82 : vector<1x8x128xf32> to vector<8x128xf32>
    %84 = vector.shape_cast %80 : vector<8x128xf32> to vector<1x8x128xf32>
    tpu.vector_store %arg7[%81, %c0_45, %c0_46], %84 {strides = array<i32>} : memref<8x8x128xf32, #tpu.memory_space<vmem>>, vector<1x8x128xf32>,
    %c8_i32_47 = arith.constant 8 : i32
    %85 = arith.muli %arg1, %c8_i32_47 : i32
    %86 = arith.addi %85, %c4_i32 : i32
    %c8_i32_48 = arith.constant 8 : i32
    %87 = arith.cmpi slt, %86, %c8_i32_48 : i32
    %88 = arith.select %87, %80, %73 : vector<8x128xf32>
    %c5_i32 = arith.constant 5 : i32
    %cst_49 = arith.constant dense<0.000000e+00> : vector<8x128xf32>
    %89 = tpu.matmul %88, %12, %cst_49 {dimension_numbers = #tpu.dot_dimension_numbers<[1], [0], [0], [1], [0, 0, 1, 1], [], []>} : vector<8x128xf32>, vector<128x128xf32>, vector<8x128xf32> -> vector<8x128xf32>
    %90 = arith.index_cast %c5_i32 : i32 to index
    %c0_50 = arith.constant 0 : index
    %c0_51 = arith.constant 0 : index
    %91 = vector.load %arg10[%90, %c0_50, %c0_51] : memref<8x8x128xf32, #tpu.memory_space<vmem>>, vector<1x8x128xf32>
    %92 = vector.shape_cast %91 : vector<1x8x128xf32> to vector<8x128xf32>
    %93 = arith.addf %92, %89 : vector<8x128xf32>
    %94 = arith.addf %93, %11 : vector<8x128xf32>
    %95 = math.tanh %94 : vector<8x128xf32>
    %96 = arith.index_cast %c5_i32 : i32 to index
    %c0_52 = arith.constant 0 : index
    %c0_53 = arith.constant 0 : index
    %97 = vector.load %arg7[%96, %c0_52, %c0_53] : memref<8x8x128xf32, #tpu.memory_space<vmem>>, vector<1x8x128xf32>
    %98 = vector.shape_cast %97 : vector<1x8x128xf32> to vector<8x128xf32>
    %99 = vector.shape_cast %95 : vector<8x128xf32> to vector<1x8x128xf32>
    tpu.vector_store %arg7[%96, %c0_52, %c0_53], %99 {strides = array<i32>} : memref<8x8x128xf32, #tpu.memory_space<vmem>>, vector<1x8x128xf32>,
    %c8_i32_54 = arith.constant 8 : i32
    %100 = arith.muli %arg1, %c8_i32_54 : i32
    %101 = arith.addi %100, %c5_i32 : i32
    %c8_i32_55 = arith.constant 8 : i32
    %102 = arith.cmpi slt, %101, %c8_i32_55 : i32
    %103 = arith.select %102, %95, %88 : vector<8x128xf32>
    %c6_i32 = arith.constant 6 : i32
    %cst_56 = arith.constant dense<0.000000e+00> : vector<8x128xf32>
    %104 = tpu.matmul %103, %12, %cst_56 {dimension_numbers = #tpu.dot_dimension_numbers<[1], [0], [0], [1], [0, 0, 1, 1], [], []>} : vector<8x128xf32>, vector<128x128xf32>, vector<8x128xf32> -> vector<8x128xf32>
    %105 = arith.index_cast %c6_i32 : i32 to index
    %c0_57 = arith.constant 0 : index
    %c0_58 = arith.constant 0 : index
    %106 = vector.load %arg10[%105, %c0_57, %c0_58] : memref<8x8x128xf32, #tpu.memory_space<vmem>>, vector<1x8x128xf32>
    %107 = vector.shape_cast %106 : vector<1x8x128xf32> to vector<8x128xf32>
    %108 = arith.addf %107, %104 : vector<8x128xf32>
    %109 = arith.addf %108, %11 : vector<8x128xf32>
    %110 = math.tanh %109 : vector<8x128xf32>
    %111 = arith.index_cast %c6_i32 : i32 to index
    %c0_59 = arith.constant 0 : index
    %c0_60 = arith.constant 0 : index
    %112 = vector.load %arg7[%111, %c0_59, %c0_60] : memref<8x8x128xf32, #tpu.memory_space<vmem>>, vector<1x8x128xf32>
    %113 = vector.shape_cast %112 : vector<1x8x128xf32> to vector<8x128xf32>
    %114 = vector.shape_cast %110 : vector<8x128xf32> to vector<1x8x128xf32>
    tpu.vector_store %arg7[%111, %c0_59, %c0_60], %114 {strides = array<i32>} : memref<8x8x128xf32, #tpu.memory_space<vmem>>, vector<1x8x128xf32>,
    %c8_i32_61 = arith.constant 8 : i32
    %115 = arith.muli %arg1, %c8_i32_61 : i32
    %116 = arith.addi %115, %c6_i32 : i32
    %c8_i32_62 = arith.constant 8 : i32
    %117 = arith.cmpi slt, %116, %c8_i32_62 : i32
    %118 = arith.select %117, %110, %103 : vector<8x128xf32>
    %c7_i32 = arith.constant 7 : i32
    %cst_63 = arith.constant dense<0.000000e+00> : vector<8x128xf32>
    %119 = tpu.matmul %118, %12, %cst_63 {dimension_numbers = #tpu.dot_dimension_numbers<[1], [0], [0], [1], [0, 0, 1, 1], [], []>} : vector<8x128xf32>, vector<128x128xf32>, vector<8x128xf32> -> vector<8x128xf32>
    %120 = arith.index_cast %c7_i32 : i32 to index
    %c0_64 = arith.constant 0 : index
    %c0_65 = arith.constant 0 : index
    %121 = vector.load %arg10[%120, %c0_64, %c0_65] : memref<8x8x128xf32, #tpu.memory_space<vmem>>, vector<1x8x128xf32>
    %122 = vector.shape_cast %121 : vector<1x8x128xf32> to vector<8x128xf32>
    %123 = arith.addf %122, %119 : vector<8x128xf32>
    %124 = arith.addf %123, %11 : vector<8x128xf32>
    %125 = math.tanh %124 : vector<8x128xf32>
    %126 = arith.index_cast %c7_i32 : i32 to index
    %c0_66 = arith.constant 0 : index
    %c0_67 = arith.constant 0 : index
    %127 = vector.load %arg7[%126, %c0_66, %c0_67] : memref<8x8x128xf32, #tpu.memory_space<vmem>>, vector<1x8x128xf32>
    %128 = vector.shape_cast %127 : vector<1x8x128xf32> to vector<8x128xf32>
    %129 = vector.shape_cast %125 : vector<8x128xf32> to vector<1x8x128xf32>
    tpu.vector_store %arg7[%126, %c0_66, %c0_67], %129 {strides = array<i32>} : memref<8x8x128xf32, #tpu.memory_space<vmem>>, vector<1x8x128xf32>,
    %c8_i32_68 = arith.constant 8 : i32
    %130 = arith.muli %arg1, %c8_i32_68 : i32
    %131 = arith.addi %130, %c7_i32 : i32
    %c8_i32_69 = arith.constant 8 : i32
    %132 = arith.cmpi slt, %131, %c8_i32_69 : i32
    %133 = arith.select %132, %125, %118 : vector<8x128xf32>
    %c8_i32_70 = arith.constant 8 : i32
    %c0_71 = arith.constant 0 : index
    %c0_72 = arith.constant 0 : index
    %134 = vector.load %arg9[%c0_71, %c0_72] : memref<8x128xf32, #tpu.memory_space<vmem>>, vector<8x128xf32>
    tpu.vector_store %arg9[%c0_71, %c0_72], %133 {strides = array<i32>} : memref<8x128xf32, #tpu.memory_space<vmem>>, vector<8x128xf32>,
    %c0_i32_73 = arith.constant 0 : i32
    %135 = arith.cmpi eq, %arg1, %c0_i32_73 : i32
    %136 = arith.extui %135 : i1 to i32
    %c0_i32_74 = arith.constant 0 : i32
    %137 = arith.cmpi ne, %136, %c0_i32_74 : i32
    scf.if %137 {
      %c0_75 = arith.constant 0 : index
      %c0_76 = arith.constant 0 : index
      %138 = vector.load %arg8[%c0_75, %c0_76] : memref<8x128xf32, #tpu.memory_space<vmem>>, vector<8x128xf32>
      tpu.vector_store %arg8[%c0_75, %c0_76], %133 {strides = array<i32>} : memref<8x128xf32, #tpu.memory_space<vmem>>, vector<8x128xf32>,
    } else {
    }
    return
  }
  func.func @transform_0(%arg0: i32, %arg1: i32) -> (i32, i32, i32) {
    %c0_i32 = arith.constant 0 : i32
    %c0_i32_0 = arith.constant 0 : i32
    return %arg1, %arg0, %c0_i32 : i32, i32, i32
  }
  func.func @transform_1(%arg0: i32, %arg1: i32) -> (i32, i32) {
    %c0_i32 = arith.constant 0 : i32
    %c0_i32_0 = arith.constant 0 : i32
    return %arg0, %c0_i32 : i32, i32
  }
  func.func @transform_2(%arg0: i32, %arg1: i32) -> (i32, i32) {
    %c0_i32 = arith.constant 0 : i32
    %c0_i32_0 = arith.constant 0 : i32
    %c0_i32_1 = arith.constant 0 : i32
    return %c0_i32, %c0_i32_0 : i32, i32
  }
  func.func @transform_3(%arg0: i32, %arg1: i32) -> (i32, i32) {
    %c0_i32 = arith.constant 0 : i32
    %c0_i32_0 = arith.constant 0 : i32
    %c0_i32_1 = arith.constant 0 : i32
    return %c0_i32, %c0_i32_0 : i32, i32
  }
  func.func @transform_4(%arg0: i32, %arg1: i32) -> (i32, i32) {
    %c0_i32 = arith.constant 0 : i32
    %c0_i32_0 = arith.constant 0 : i32
    %c0_i32_1 = arith.constant 0 : i32
    return %c0_i32, %c0_i32_0 : i32, i32
  }
  func.func @transform_5(%arg0: i32, %arg1: i32) -> (i32, i32, i32) {
    %c0_i32 = arith.constant 0 : i32
    %c0_i32_0 = arith.constant 0 : i32
    return %arg1, %arg0, %c0_i32 : i32, i32, i32
  }
  func.func @transform_6(%arg0: i32, %arg1: i32) -> (i32, i32) {
    %c0_i32 = arith.constant 0 : i32
    %c0_i32_0 = arith.constant 0 : i32
    return %arg0, %c0_i32 : i32, i32
  }
}

module attributes {stable_mosaic.version = 11 : i64} {
  func.func @h2o_kernel(%arg0: i32, %arg1: memref<64x128xf32, #tpu.memory_space<vmem>>, %arg2: memref<128x128xf32, #tpu.memory_space<vmem>>, %arg3: memref<1x128xf32, #tpu.memory_space<vmem>>, %arg4: memref<64x128xf32, #tpu.memory_space<vmem>>) attributes {dimension_semantics = [#tpu.dimension_semantics<parallel>], iteration_bounds = array<i64: 1>, scalar_prefetch = 0 : i64, scratch_operands = 0 : i64, tpu.core_type = #tpu.core_type<tc>, window_params = [{transform_indices = @transform_0, window_bounds = array<i64: 64, 128>}, {pipeline_mode = #tpu.pipeline_mode<synchronous>, transform_indices = @transform_1, window_bounds = array<i64: 128, 128>}, {pipeline_mode = #tpu.pipeline_mode<synchronous>, transform_indices = @transform_2, window_bounds = array<i64: 1, 128>}, {transform_indices = @transform_3, window_bounds = array<i64: 64, 128>}]} {
    %c0 = arith.constant 0 : index
    %c0_0 = arith.constant 0 : index
    %0 = vector.load %arg1[%c0, %c0_0] : memref<64x128xf32, #tpu.memory_space<vmem>>, vector<64x128xf32>
    %c0_1 = arith.constant 0 : index
    %c0_2 = arith.constant 0 : index
    %1 = vector.load %arg2[%c0_1, %c0_2] : memref<128x128xf32, #tpu.memory_space<vmem>>, vector<128x128xf32>
    %cst = arith.constant dense<0.000000e+00> : vector<64x128xf32>
    %2 = tpu.matmul %0, %1, %cst {dimension_numbers = #tpu.dot_dimension_numbers<[1], [0], [0], [1], [0, 0, 1, 1], [], []>} : vector<64x128xf32>, vector<128x128xf32>, vector<64x128xf32> -> vector<64x128xf32>
    %c0_3 = arith.constant 0 : index
    %c0_4 = arith.constant 0 : index
    %3 = vector.load %arg3[%c0_3, %c0_4] : memref<1x128xf32, #tpu.memory_space<vmem>>, vector<1x128xf32>
    %4 = vector.broadcast %3 : vector<1x128xf32> to vector<64x128xf32>
    %5 = arith.addf %2, %4 : vector<64x128xf32>
    %c0_5 = arith.constant 0 : index
    %c0_6 = arith.constant 0 : index
    %6 = vector.load %arg4[%c0_5, %c0_6] : memref<64x128xf32, #tpu.memory_space<vmem>>, vector<64x128xf32>
    tpu.vector_store %arg4[%c0_5, %c0_6], %5 {strides = array<i32>} : memref<64x128xf32, #tpu.memory_space<vmem>>, vector<64x128xf32>,
    return
  }
  func.func @transform_0(%arg0: i32) -> (i32, i32) {
    %c0_i32 = arith.constant 0 : i32
    %c0_i32_0 = arith.constant 0 : i32
    return %arg0, %c0_i32 : i32, i32
  }
  func.func @transform_1(%arg0: i32) -> (i32, i32) {
    %c0_i32 = arith.constant 0 : i32
    %c0_i32_0 = arith.constant 0 : i32
    %c0_i32_1 = arith.constant 0 : i32
    return %c0_i32, %c0_i32_0 : i32, i32
  }
  func.func @transform_2(%arg0: i32) -> (i32, i32) {
    %c0_i32 = arith.constant 0 : i32
    %c0_i32_0 = arith.constant 0 : i32
    %c0_i32_1 = arith.constant 0 : i32
    return %c0_i32, %c0_i32_0 : i32, i32
  }
  func.func @transform_3(%arg0: i32) -> (i32, i32) {
    %c0_i32 = arith.constant 0 : i32
    %c0_i32_0 = arith.constant 0 : i32
    return %arg0, %c0_i32 : i32, i32
  }
}

</mosaic_0001>

<llo_original>
// kernel: rnn_forward.3
$region0: #{rnn_forward.3}
  #allocation0 [shape = 'u32[]', space=smem, size = 0x4, offset = 0x4, fixed_abs, tag = 'smem constant byte address 0x4 - core index']
  #allocation1 [shape = 'u32[144,128]{1,0:T(1,128)}', space=vmem, size = 0x12000, scoped, tag = 'internal scratch']
  %s0 = inlined_call_operand.hbm [shape: f32[64,128], index: 0, kind: input, shape index: {}]
  %s1 = inlined_call_operand.hbm [shape: f32[128,128], index: 1, kind: input, shape index: {}]
  %s2 = inlined_call_operand.hbm [shape: f32[1,128], index: 2, kind: input, shape index: {}]
  %s3 = inlined_call_operand.hbm [shape: f32[64,128], index: 3, kind: output, shape index: {}]
  %s4 = sld [smem:[#allocation0]]
  $region34: #{rnn_forward.3} parent=0
    _
  %s6 = ssub.s32 1, %s4
  %s7 = scalar_select 0, %s6, %s4
  $region1: #{rnn_forward.3} parent=0
    #allocation2 [shape = 'u8[32768]{0}', space=vmem, size = 0x8000, scoped, tag = 'input window, operand 0, single buffered']
    #allocation3 [shape = 's32[1]{0}', space=sflag, size = 0x4, scoped, tag = 'scoped memory for rnn_forward.3']
    #allocation4 [shape = 's32[1]{0}', space=sflag, size = 0x4, scoped, tag = 'scoped memory for rnn_forward.3']
    #allocation5 [shape = 'u8[65536]{0}', space=vmem, size = 0x10000, scoped, tag = 'input window, operand 1, single buffered']
    #allocation6 [shape = 's32[1]{0}', space=sflag, size = 0x4, scoped, tag = 'scoped memory for rnn_forward.3']
    #allocation7 [shape = 'u8[512]{0}', space=vmem, size = 0x400, scoped, tag = 'input window, operand 2, single buffered']
    #allocation8 [shape = 'u8[32768]{0}', space=vmem, size = 0x8000, scoped, tag = 'output window, operand 0, single buffered']
    %8 = vsyncpa [#allocation3], 0
    %9 = vsyncpa [#allocation6], 0
    %10 = vsyncpa [#allocation4], 0
    // Predicated region
    $region2: #{rnn_forward.3} parent=1 // pred_check
      _
    $region3: #{rnn_forward.3} parent=1 // pred_check_branch
      %12 = sbr.rel (0) target = $region5
    $region4: #{rnn_forward.3} parent=1 // pred_region
      %s14 = ssub.s32 1024, 1024
      %15 = vsyncadd [#allocation3], %s14
      %s16 = sshll.u32 [#allocation2], 4
      %s17 = int_to_ptr.vmem [resolvable:$true] %s16
      %22 = dma.hbm_to_vmem [thread:$0]  %s0, 1024, %s17, [#allocation3], 128, 128, 8
    $region5: #{rnn_forward.3} parent=1 // pred_fallthru
      _
    // Predicated region
    $region6: #{rnn_forward.3} parent=1 // pred_check
      _
    $region7: #{rnn_forward.3} parent=1 // pred_check_branch
      %24 = sbr.rel (0) target = $region9
    $region8: #{rnn_forward.3} parent=1 // pred_region
      %s26 = ssub.s32 2048, 2048
      %27 = vsyncadd [#allocation6], %s26
      %s28 = sshll.u32 [#allocation5], 4
      %s29 = int_to_ptr.vmem [resolvable:$true] %s28
      %34 = dma.hbm_to_vmem [thread:$0]  %s1, 2048, %s29, [#allocation6], 128, 128, 8
    $region9: #{rnn_forward.3} parent=1 // pred_fallthru
      _
    // Predicated region
    $region10: #{rnn_forward.3} parent=1 // pred_check
      _
    $region11: #{rnn_forward.3} parent=1 // pred_check_branch
      %36 = sbr.rel (0) target = $region13
    $region12: #{rnn_forward.3} parent=1 // pred_region
      %s38 = ssub.s32 16, 16
      %39 = vsyncadd [#allocation6], %s38
      %s41 = sshll.u32 [#allocation7], 4
      %s42 = int_to_ptr.vmem [resolvable:$true] %s41
      %44 = dma.hbm_to_vmem [thread:$0]  %s2, 16, %s42, [#allocation6]
    $region13: #{rnn_forward.3} parent=1 // pred_fallthru
      _
    // Predicated region
    $region14: #{rnn_forward.3} parent=1 // pred_check
      _
    $region15: #{rnn_forward.3} parent=1 // pred_check_branch
      %46 = sbr.rel (0) target = $region17
    $region16: #{rnn_forward.3} parent=1 // pred_region
      %47 = dma.done [#allocation3], 1024
    $region17: #{rnn_forward.3} parent=1 // pred_fallthru
      _
    // Predicated region
    $region18: #{rnn_forward.3} parent=1 // pred_check
      _
    $region19: #{rnn_forward.3} parent=1 // pred_check_branch
      %49 = sbr.rel (0) target = $region21
    $region20: #{rnn_forward.3} parent=1 // pred_region
      %50 = dma.done [#allocation6], 2048
    $region21: #{rnn_forward.3} parent=1 // pred_fallthru
      _
    // Predicated region
    $region22: #{rnn_forward.3} parent=1 // pred_check
      _
    $region23: #{rnn_forward.3} parent=1 // pred_check_branch
      %52 = sbr.rel (0) target = $region25
    $region24: #{rnn_forward.3} parent=1 // pred_region
      %53 = dma.done [#allocation6], 16
    $region25: #{rnn_forward.3} parent=1 // pred_fallthru
      _
    %v54 = vld [vmem:[#allocation2] sm:$0xff]
    %v55 = vld [vmem:[#allocation2 + $0x8] sm:$0xff]
    %v56 = vld [vmem:[#allocation2 + $0x10] sm:$0xff]
    %v57 = vld [vmem:[#allocation2 + $0x18] sm:$0xff]
    %v58 = vld [vmem:[#allocation2 + $0x20] sm:$0xff]
    %v59 = vld [vmem:[#allocation2 + $0x28] sm:$0xff]
    %v60 = vld [vmem:[#allocation2 + $0x30] sm:$0xff]
    %v61 = vld [vmem:[#allocation2 + $0x38] sm:$0xff]
    %v62 = vld [vmem:[#allocation5] sm:$0xff]
    %v63 = vld [vmem:[#allocation5 + $0x8] sm:$0xff]
    %v64 = vld [vmem:[#allocation5 + $0x10] sm:$0xff]
    %v65 = vld [vmem:[#allocation5 + $0x18] sm:$0xff]
    %v66 = vld [vmem:[#allocation5 + $0x20] sm:$0xff]
    %v67 = vld [vmem:[#allocation5 + $0x28] sm:$0xff]
    %v68 = vld [vmem:[#allocation5 + $0x30] sm:$0xff]
    %v69 = vld [vmem:[#allocation5 + $0x38] sm:$0xff]
    %v70 = vld [vmem:[#allocation5 + $0x40] sm:$0xff]
    %v71 = vld [vmem:[#allocation5 + $0x48] sm:$0xff]
    %v72 = vld [vmem:[#allocation5 + $0x50] sm:$0xff]
    %v73 = vld [vmem:[#allocation5 + $0x58] sm:$0xff]
    %v74 = vld [vmem:[#allocation5 + $0x60] sm:$0xff]
    %v75 = vld [vmem:[#allocation5 + $0x68] sm:$0xff]
    %v76 = vld [vmem:[#allocation5 + $0x70] sm:$0xff]
    %v77 = vld [vmem:[#allocation5 + $0x78] sm:$0xff]
    %v78 = vld [vmem:[#allocation7] sm:$0x1]
    %v80 = vlaneseq
    %v81 = vshrl.u32 %v80, 7
    %v82 = vsub.s32 0, %v81
    %v83 = vrot.slane %v78, %v82
    %85 = vmatprep.subr.mxu0 0.0
    %86 = vmatpush1.msra.mxu0 %v62
    %87 = vmatprep.subr.mxu0 0.0
    %88 = vmatpush1.msra.mxu0 %v63
    %89 = vmatprep.subr.mxu0 0.0
    %90 = vmatpush1.msra.mxu0 %v64
    %91 = vmatprep.subr.mxu0 0.0
    %92 = vmatpush1.msra.mxu0 %v65
    %93 = vmatprep.subr.mxu0 0.0
    %94 = vmatpush1.msra.mxu0 %v66
    %95 = vmatprep.subr.mxu0 0.0
    %96 = vmatpush1.msra.mxu0 %v67
    %97 = vmatprep.subr.mxu0 0.0
    %98 = vmatpush1.msra.mxu0 %v68
    %99 = vmatprep.subr.mxu0 0.0
    %100 = vmatpush1.msra.mxu0 %v69
    %101 = vmatprep.subr.mxu0 0.0
    %102 = vmatpush1.msra.mxu0 %v70
    %103 = vmatprep.subr.mxu0 0.0
    %104 = vmatpush1.msra.mxu0 %v71
    %105 = vmatprep.subr.mxu0 0.0
    %106 = vmatpush1.msra.mxu0 %v72
    %107 = vmatprep.subr.mxu0 0.0
    %108 = vmatpush1.msra.mxu0 %v73
    %109 = vmatprep.subr.mxu0 0.0
    %110 = vmatpush1.msra.mxu0 %v74
    %111 = vmatprep.subr.mxu0 0.0
    %112 = vmatpush1.msra.mxu0 %v75
    %113 = vmatprep.subr.mxu0 0.0
    %114 = vmatpush1.msra.mxu0 %v76
    %115 = vmatprep.subr.mxu0 0.0
    %116 = vmatpush1.msra.mxu0 %v77
    %117 = vmatprep.subr.mxu0 0.0
    %118 = vmatpush1.msra.mxu0 0.0
    %119 = vmatprep.subr.mxu0 0.0
    %120 = vmatpush1.msra.mxu0 0.0
    %121 = vmatprep.subr.mxu0 0.0
    %122 = vmatpush1.msra.mxu0 0.0
    %123 = vmatprep.subr.mxu0 0.0
    %124 = vmatpush1.msra.mxu0 0.0
    %125 = vmatprep.subr.mxu0 0.0
    %126 = vmatpush1.msra.mxu0 0.0
    %127 = vmatprep.subr.mxu0 0.0
    %128 = vmatpush1.msra.mxu0 0.0
    %129 = vmatprep.subr.mxu0 0.0
    %130 = vmatpush1.msra.mxu0 0.0
    %131 = vmatprep.subr.mxu0 0.0
    %132 = vmatpush1.msra.mxu0 0.0
    %133 = vmatprep.subr.mxu0 0.0
    %134 = vmatpush1.msra.mxu0 0.0
    %135 = vmatprep.subr.mxu0 0.0
    %136 = vmatpush1.msra.mxu0 0.0
    %137 = vmatprep.subr.mxu0 0.0
    %138 = vmatpush1.msra.mxu0 0.0
    %139 = vmatprep.subr.mxu0 0.0
    %140 = vmatpush1.msra.mxu0 0.0
    %141 = vmatprep.subr.mxu0 0.0
    %142 = vmatpush1.msra.mxu0 0.0
    %143 = vmatprep.subr.mxu0 0.0
    %144 = vmatpush1.msra.mxu0 0.0
    %145 = vmatprep.subr.mxu0 0.0
    %146 = vmatpush1.msra.mxu0 0.0
    %147 = vmatprep.subr.mxu0 0.0
    %148 = vmatpush1.msra.mxu0 0.0
    %149 = vmatprep.mubr.f32.mxu0 0.0
    %150 = vmatmul.mubr.f32.gmra.mrb[0].mxu0 %v54
    %v151 = vpop.f32.mrb[0].mxu0
    %v152 = vadd.f32 %v83, %v151
    %v153 = vpop.f32.mrb[0].mxu0
    %154 = vmatprep.mubr.f32.mxu0 0.0
    %155 = vmatmul.mubr.f32.gmra.mrb[0].mxu0 %v55
    %v156 = vpop.f32.mrb[0].mxu0
    %v157 = vadd.f32 %v83, %v156
    %v158 = vpop.f32.mrb[0].mxu0
    %159 = vmatprep.mubr.f32.mxu0 0.0
    %160 = vmatmul.mubr.f32.gmra.mrb[0].mxu0 %v56
    %v161 = vpop.f32.mrb[0].mxu0
    %v162 = vadd.f32 %v83, %v161
    %v163 = vpop.f32.mrb[0].mxu0
    %164 = vmatprep.mubr.f32.mxu0 0.0
    %165 = vmatmul.mubr.f32.gmra.mrb[0].mxu0 %v57
    %v166 = vpop.f32.mrb[0].mxu0
    %v167 = vadd.f32 %v83, %v166
    %v168 = vpop.f32.mrb[0].mxu0
    %169 = vmatprep.mubr.f32.mxu0 0.0
    %170 = vmatmul.mubr.f32.gmra.mrb[0].mxu0 %v58
    %v171 = vpop.f32.mrb[0].mxu0
    %v172 = vadd.f32 %v83, %v171
    %v173 = vpop.f32.mrb[0].mxu0
    %174 = vmatprep.mubr.f32.mxu0 0.0
    %175 = vmatmul.mubr.f32.gmra.mrb[0].mxu0 %v59
    %v176 = vpop.f32.mrb[0].mxu0
    %v177 = vadd.f32 %v83, %v176
    %v178 = vpop.f32.mrb[0].mxu0
    %179 = vmatprep.mubr.f32.mxu0 0.0
    %180 = vmatmul.mubr.f32.gmra.mrb[0].mxu0 %v60
    %v181 = vpop.f32.mrb[0].mxu0
    %v182 = vadd.f32 %v83, %v181
    %v183 = vpop.f32.mrb[0].mxu0
    %184 = vmatprep.mubr.f32.mxu0 0.0
    %185 = vmatmul.mubr.f32.gmra.mrb[0].mxu0 %v61
    %v186 = vpop.f32.mrb[0].mxu0
    %v187 = vadd.f32 %v83, %v186
    %v188 = vpop.f32.mrb[0].mxu0
    %189 = vdwg.mxu0
    %190 = vst [vmem:[#allocation8] sm:$0xff] %v152
    %191 = vst [vmem:[#allocation8 + $0x8] sm:$0xff] %v157
    %192 = vst [vmem:[#allocation8 + $0x10] sm:$0xff] %v162
    %193 = vst [vmem:[#allocation8 + $0x18] sm:$0xff] %v167
    %194 = vst [vmem:[#allocation8 + $0x20] sm:$0xff] %v172
    %195 = vst [vmem:[#allocation8 + $0x28] sm:$0xff] %v177
    %196 = vst [vmem:[#allocation8 + $0x30] sm:$0xff] %v182
    %197 = vst [vmem:[#allocation8 + $0x38] sm:$0xff] %v187
    // Predicated region
    $region26: #{rnn_forward.3} parent=1 // pred_check
      _
    $region27: #{rnn_forward.3} parent=1 // pred_check_branch
      %199 = sbr.rel (0) target = $region29
    $region28: #{rnn_forward.3} parent=1 // pred_region
      %s201 = ssub.s32 1024, 1024
      %202 = vsyncadd [#allocation4], %s201
      %s203 = sshll.u32 [#allocation8], 4
      %s204 = int_to_ptr.vmem [resolvable:$true] %s203
      %209 = dma.vmem_to_hbm [thread:$0]  %s204, 1024, %s3, [#allocation4], 128, 128, 8
    $region29: #{rnn_forward.3} parent=1 // pred_fallthru
      _
    // Predicated region
    $region30: #{rnn_forward.3} parent=1 // pred_check
      _
    $region31: #{rnn_forward.3} parent=1 // pred_check_branch
      %211 = sbr.rel (0) target = $region33
    $region32: #{rnn_forward.3} parent=1 // pred_region
      %212 = dma.done [#allocation4], 1024
    $region33: #{rnn_forward.3} parent=1 // pred_fallthru
      _
    %213 = vsyncpa [#allocation3], 1
    %214 = vsyncpa [#allocation6], 1
    %215 = vsyncpa [#allocation4], 1

// kernel: rnn_forward.2
$region0: #{rnn_forward.2}
  #allocation0 [shape = 'u32[]', space=smem, size = 0x4, offset = 0x4, fixed_abs, tag = 'smem constant byte address 0x4 - core index']
  #allocation1 [shape = 'u32[144,128]{1,0:T(1,128)}', space=vmem, size = 0x12000, scoped, tag = 'internal scratch']
  #allocation2 [shape = 'f32[8,128]{1,0:T(8,128)}', space=vmem, size = 0x1000, scoped, tag = 'scratch operand']
  #allocation3 [shape = 'f32[8,8,128]{2,1,0:T(8,128)}', space=vmem, size = 0x8000, scoped, tag = 'scratch operand']
  %s0 = inlined_call_operand.hbm [shape: f32[8,8,128], index: 0, kind: input, shape index: {}]
  %s1 = inlined_call_operand.hbm [shape: f32[8,128], index: 1, kind: input, shape index: {}]
  %s2 = inlined_call_operand.hbm [shape: f32[128,128], index: 2, kind: input, shape index: {}]
  %s3 = inlined_call_operand.hbm [shape: f32[128,128], index: 3, kind: input, shape index: {}]
  %s4 = inlined_call_operand.hbm [shape: f32[1,128], index: 4, kind: input, shape index: {}]
  %s5 = inlined_call_operand.hbm [shape: f32[8,8,128], index: 5, kind: output, shape index: {0}]
  %s6 = inlined_call_operand.hbm [shape: f32[8,128], index: 6, kind: output, shape index: {1}]
  %7 = xla_tuple %s5, %s6
  %s8 = sld [smem:[#allocation0]]
  $region66: #{rnn_forward.2} parent=0
    _
  %s10 = ssub.s32 1, %s8
  %s11 = scalar_select 0, %s10, %s8
  $region1: #{rnn_forward.2} parent=0
    #allocation4 [shape = 'u8[32768]{0}', space=vmem, size = 0x8000, scoped, tag = 'input window, operand 0, single buffered']
    #allocation5 [shape = 's32[1]{0}', space=sflag, size = 0x4, scoped, tag = 'scoped memory for rnn_forward.2']
    #allocation6 [shape = 's32[1]{0}', space=sflag, size = 0x4, scoped, tag = 'scoped memory for rnn_forward.2']
    #allocation7 [shape = 'u8[4096]{0}', space=vmem, size = 0x1000, scoped, tag = 'input window, operand 1, single buffered']
    #allocation8 [shape = 's32[1]{0}', space=sflag, size = 0x4, scoped, tag = 'scoped memory for rnn_forward.2']
    #allocation9 [shape = 'u8[65536]{0}', space=vmem, size = 0x10000, scoped, tag = 'input window, operand 2, single buffered']
    #allocation10 [shape = 'u8[65536]{0}', space=vmem, size = 0x10000, scoped, tag = 'input window, operand 3, single buffered']
    #allocation11 [shape = 's32[1]{0}', space=sflag, size = 0x4, scoped, tag = 'scoped memory for rnn_forward.2']
    #allocation12 [shape = 'u8[512]{0}', space=vmem, size = 0x400, scoped, tag = 'input window, operand 4, single buffered']
    #allocation13 [shape = 'u8[32768]{0}', space=vmem, size = 0x8000, scoped, tag = 'output window, operand 0, single buffered']
    #allocation14 [shape = 'u8[4096]{0}', space=vmem, size = 0x1000, scoped, tag = 'output window, operand 1, single buffered']
    #allocation15 [shape = 's32[1]{0}', space=sflag, size = 0x4, scoped, tag = 'scoped memory for rnn_forward.2']
    %12 = vsyncpa [#allocation5], 0
    %13 = vsyncpa [#allocation8], 0
    %14 = vsyncpa [#allocation11], 0
    %15 = vsyncpa [#allocation6], 0
    %16 = vsyncpa [#allocation15], 0
    // Predicated region
    $region2: #{rnn_forward.2} parent=1 // pred_check
      _
    $region3: #{rnn_forward.2} parent=1 // pred_check_branch
      %18 = sbr.rel (0) target = $region5
    $region4: #{rnn_forward.2} parent=1 // pred_region
      %s20 = ssub.s32 1024, 1024
      %21 = vsyncadd [#allocation5], %s20
      %s22 = sshll.u32 [#allocation4], 4
      %s23 = int_to_ptr.vmem [resolvable:$true] %s22
      %28 = dma.hbm_to_vmem [thread:$0]  %s0, 1024, %s23, [#allocation5], 128, 128, 8
    $region5: #{rnn_forward.2} parent=1 // pred_fallthru
      _
    // Predicated region
    $region6: #{rnn_forward.2} parent=1 // pred_check
      _
    $region7: #{rnn_forward.2} parent=1 // pred_check_branch
      %30 = sbr.rel (0) target = $region9
    $region8: #{rnn_forward.2} parent=1 // pred_region
      %s32 = ssub.s32 128, 128
      %33 = vsyncadd [#allocation8], %s32
      %s35 = sshll.u32 [#allocation7], 4
      %s36 = int_to_ptr.vmem [resolvable:$true] %s35
      %38 = dma.hbm_to_vmem [thread:$0]  %s1, 128, %s36, [#allocation8]
    $region9: #{rnn_forward.2} parent=1 // pred_fallthru
      _
    // Predicated region
    $region10: #{rnn_forward.2} parent=1 // pred_check
      _
    $region11: #{rnn_forward.2} parent=1 // pred_check_branch
      %40 = sbr.rel (0) target = $region13
    $region12: #{rnn_forward.2} parent=1 // pred_region
      %s42 = ssub.s32 2048, 2048
      %43 = vsyncadd [#allocation8], %s42
      %s44 = sshll.u32 [#allocation9], 4
      %s45 = int_to_ptr.vmem [resolvable:$true] %s44
      %50 = dma.hbm_to_vmem [thread:$0]  %s2, 2048, %s45, [#allocation8], 128, 128, 8
    $region13: #{rnn_forward.2} parent=1 // pred_fallthru
      _
    // Predicated region
    $region14: #{rnn_forward.2} parent=1 // pred_check
      _
    $region15: #{rnn_forward.2} parent=1 // pred_check_branch
      %52 = sbr.rel (0) target = $region17
    $region16: #{rnn_forward.2} parent=1 // pred_region
      %s54 = ssub.s32 2048, 2048
      %55 = vsyncadd [#allocation11], %s54
      %s56 = sshll.u32 [#allocation10], 4
      %s57 = int_to_ptr.vmem [resolvable:$true] %s56
      %62 = dma.hbm_to_vmem [thread:$0]  %s3, 2048, %s57, [#allocation11], 128, 128, 8
    $region17: #{rnn_forward.2} parent=1 // pred_fallthru
      _
    // Predicated region
    $region18: #{rnn_forward.2} parent=1 // pred_check
      _
    $region19: #{rnn_forward.2} parent=1 // pred_check_branch
      %64 = sbr.rel (0) target = $region21
    $region20: #{rnn_forward.2} parent=1 // pred_region
      %s66 = ssub.s32 16, 16
      %67 = vsyncadd [#allocation11], %s66
      %s69 = sshll.u32 [#allocation12], 4
      %s70 = int_to_ptr.vmem [resolvable:$true] %s69
      %72 = dma.hbm_to_vmem [thread:$0]  %s4, 16, %s70, [#allocation11]
    $region21: #{rnn_forward.2} parent=1 // pred_fallthru
      _
    // Predicated region
    $region22: #{rnn_forward.2} parent=1 // pred_check
      _
    $region23: #{rnn_forward.2} parent=1 // pred_check_branch
      %74 = sbr.rel (0) target = $region25
    $region24: #{rnn_forward.2} parent=1 // pred_region
      %75 = dma.done [#allocation5], 1024
    $region25: #{rnn_forward.2} parent=1 // pred_fallthru
      _
    // Predicated region
    $region26: #{rnn_forward.2} parent=1 // pred_check
      _
    $region27: #{rnn_forward.2} parent=1 // pred_check_branch
      %77 = sbr.rel (0) target = $region29
    $region28: #{rnn_forward.2} parent=1 // pred_region
      %78 = dma.done [#allocation8], 128
    $region29: #{rnn_forward.2} parent=1 // pred_fallthru
      _
    // Predicated region
    $region30: #{rnn_forward.2} parent=1 // pred_check
      _
    $region31: #{rnn_forward.2} parent=1 // pred_check_branch
      %80 = sbr.rel (0) target = $region33
    $region32: #{rnn_forward.2} parent=1 // pred_region
      %81 = dma.done [#allocation8], 2048
    $region33: #{rnn_forward.2} parent=1 // pred_fallthru
      _
    // Predicated region
    $region34: #{rnn_forward.2} parent=1 // pred_check
      _
    $region35: #{rnn_forward.2} parent=1 // pred_check_branch
      %83 = sbr.rel (0) target = $region37
    $region36: #{rnn_forward.2} parent=1 // pred_region
      %84 = dma.done [#allocation11], 2048
    $region37: #{rnn_forward.2} parent=1 // pred_fallthru
      _
    // Predicated region
    $region38: #{rnn_forward.2} parent=1 // pred_check
      _
    $region39: #{rnn_forward.2} parent=1 // pred_check_branch
      %86 = sbr.rel (0) target = $region41
    $region40: #{rnn_forward.2} parent=1 // pred_region
      %87 = dma.done [#allocation11], 16
    $region41: #{rnn_forward.2} parent=1 // pred_fallthru
      _
    %p88 = scmp.eq.s32.totalorder 0, 0
    // Predicated region
    $region42: #{rnn_forward.2} parent=1 // pred_check
      %p89 = pneg %p88
    $region43: #{rnn_forward.2} parent=1 // pred_check_branch
      %91 = sbr.rel (%p89) target = $region45
    $region44: #{rnn_forward.2} parent=1 // pred_region
      %v92 = vld [vmem:[#allocation7] sm:$0xff]
      %93 = vst [vmem:[#allocation2] sm:$0xff] %v92
    $region45: #{rnn_forward.2} parent=1 // pred_fallthru
      _
    %v94 = vld [vmem:[#allocation4] sm:$0xff]
    %v95 = vld [vmem:[#allocation4 + $0x8] sm:$0xff]
    %v96 = vld [vmem:[#allocation4 + $0x10] sm:$0xff]
    %v97 = vld [vmem:[#allocation4 + $0x18] sm:$0xff]
    %v98 = vld [vmem:[#allocation4 + $0x20] sm:$0xff]
    %v99 = vld [vmem:[#allocation4 + $0x28] sm:$0xff]
    %v100 = vld [vmem:[#allocation4 + $0x30] sm:$0xff]
    %v101 = vld [vmem:[#allocation4 + $0x38] sm:$0xff]
    %v102 = vld [vmem:[#allocation9] sm:$0xff]
    %v103 = vld [vmem:[#allocation9 + $0x8] sm:$0xff]
    %v104 = vld [vmem:[#allocation9 + $0x10] sm:$0xff]
    %v105 = vld [vmem:[#allocation9 + $0x18] sm:$0xff]
    %v106 = vld [vmem:[#allocation9 + $0x20] sm:$0xff]
    %v107 = vld [vmem:[#allocation9 + $0x28] sm:$0xff]
    %v108 = vld [vmem:[#allocation9 + $0x30] sm:$0xff]
    %v109 = vld [vmem:[#allocation9 + $0x38] sm:$0xff]
    %v110 = vld [vmem:[#allocation9 + $0x40] sm:$0xff]
    %v111 = vld [vmem:[#allocation9 + $0x48] sm:$0xff]
    %v112 = vld [vmem:[#allocation9 + $0x50] sm:$0xff]
    %v113 = vld [vmem:[#allocation9 + $0x58] sm:$0xff]
    %v114 = vld [vmem:[#allocation9 + $0x60] sm:$0xff]
    %v115 = vld [vmem:[#allocation9 + $0x68] sm:$0xff]
    %v116 = vld [vmem:[#allocation9 + $0x70] sm:$0xff]
    %v117 = vld [vmem:[#allocation9 + $0x78] sm:$0xff]
    %118 = vmatprep.subr.mxu0 0.0
    %119 = vmatpush1.msra.mxu0 %v102
    %120 = vmatprep.subr.mxu0 0.0
    %121 = vmatpush1.msra.mxu0 %v103
    %122 = vmatprep.subr.mxu0 0.0
    %123 = vmatpush1.msra.mxu0 %v104
    %124 = vmatprep.subr.mxu0 0.0
    %125 = vmatpush1.msra.mxu0 %v105
    %126 = vmatprep.subr.mxu0 0.0
    %127 = vmatpush1.msra.mxu0 %v106
    %128 = vmatprep.subr.mxu0 0.0
    %129 = vmatpush1.msra.mxu0 %v107
    %130 = vmatprep.subr.mxu0 0.0
    %131 = vmatpush1.msra.mxu0 %v108
    %132 = vmatprep.subr.mxu0 0.0
    %133 = vmatpush1.msra.mxu0 %v109
    %134 = vmatprep.subr.mxu0 0.0
    %135 = vmatpush1.msra.mxu0 %v110
    %136 = vmatprep.subr.mxu0 0.0
    %137 = vmatpush1.msra.mxu0 %v111
    %138 = vmatprep.subr.mxu0 0.0
    %139 = vmatpush1.msra.mxu0 %v112
    %140 = vmatprep.subr.mxu0 0.0
    %141 = vmatpush1.msra.mxu0 %v113
    %142 = vmatprep.subr.mxu0 0.0
    %143 = vmatpush1.msra.mxu0 %v114
    %144 = vmatprep.subr.mxu0 0.0
    %145 = vmatpush1.msra.mxu0 %v115
    %146 = vmatprep.subr.mxu0 0.0
    %147 = vmatpush1.msra.mxu0 %v116
    %148 = vmatprep.subr.mxu0 0.0
    %149 = vmatpush1.msra.mxu0 %v117
    %150 = vmatprep.subr.mxu0 0.0
    %151 = vmatpush1.msra.mxu0 0.0
    %152 = vmatprep.subr.mxu0 0.0
    %153 = vmatpush1.msra.mxu0 0.0
    %154 = vmatprep.subr.mxu0 0.0
    %155 = vmatpush1.msra.mxu0 0.0
    %156 = vmatprep.subr.mxu0 0.0
    %157 = vmatpush1.msra.mxu0 0.0
    %158 = vmatprep.subr.mxu0 0.0
    %159 = vmatpush1.msra.mxu0 0.0
    %160 = vmatprep.subr.mxu0 0.0
    %161 = vmatpush1.msra.mxu0 0.0
    %162 = vmatprep.subr.mxu0 0.0
    %163 = vmatpush1.msra.mxu0 0.0
    %164 = vmatprep.subr.mxu0 0.0
    %165 = vmatpush1.msra.mxu0 0.0
    %166 = vmatprep.subr.mxu0 0.0
    %167 = vmatpush1.msra.mxu0 0.0
    %168 = vmatprep.subr.mxu0 0.0
    %169 = vmatpush1.msra.mxu0 0.0
    %170 = vmatprep.subr.mxu0 0.0
    %171 = vmatpush1.msra.mxu0 0.0
    %172 = vmatprep.subr.mxu0 0.0
    %173 = vmatpush1.msra.mxu0 0.0
    %174 = vmatprep.subr.mxu0 0.0
    %175 = vmatpush1.msra.mxu0 0.0
    %176 = vmatprep.subr.mxu0 0.0
    %177 = vmatpush1.msra.mxu0 0.0
    %178 = vmatprep.subr.mxu0 0.0
    %179 = vmatpush1.msra.mxu0 0.0
    %180 = vmatprep.subr.mxu0 0.0
    %181 = vmatpush1.msra.mxu0 0.0
    %182 = vmatprep.mubr.f32.mxu0 0.0
    %183 = vmatmul.mubr.f32.gmra.mrb[0].mxu0 %v94
    %v184 = vpop.f32.mrb[0].mxu0
    %v185 = vadd.f32 0.0, %v184
    %v186 = vpop.f32.mrb[0].mxu0
    %187 = vmatprep.mubr.f32.mxu0 0.0
    %188 = vmatmul.mubr.f32.gmra.mrb[0].mxu0 %v95
    %v189 = vpop.f32.mrb[0].mxu0
    %v190 = vadd.f32 0.0, %v189
    %v191 = vpop.f32.mrb[0].mxu0
    %192 = vmatprep.mubr.f32.mxu0 0.0
    %193 = vmatmul.mubr.f32.gmra.mrb[0].mxu0 %v96
    %v194 = vpop.f32.mrb[0].mxu0
    %v195 = vadd.f32 0.0, %v194
    %v196 = vpop.f32.mrb[0].mxu0
    %197 = vmatprep.mubr.f32.mxu0 0.0
    %198 = vmatmul.mubr.f32.gmra.mrb[0].mxu0 %v97
    %v199 = vpop.f32.mrb[0].mxu0
    %v200 = vadd.f32 0.0, %v199
    %v201 = vpop.f32.mrb[0].mxu0
    %202 = vmatprep.mubr.f32.mxu0 0.0
    %203 = vmatmul.mubr.f32.gmra.mrb[0].mxu0 %v98
    %v204 = vpop.f32.mrb[0].mxu0
    %v205 = vadd.f32 0.0, %v204
    %v206 = vpop.f32.mrb[0].mxu0
    %207 = vmatprep.mubr.f32.mxu0 0.0
    %208 = vmatmul.mubr.f32.gmra.mrb[0].mxu0 %v99
    %v209 = vpop.f32.mrb[0].mxu0
    %v210 = vadd.f32 0.0, %v209
    %v211 = vpop.f32.mrb[0].mxu0
    %212 = vmatprep.mubr.f32.mxu0 0.0
    %213 = vmatmul.mubr.f32.gmra.mrb[0].mxu0 %v100
    %v214 = vpop.f32.mrb[0].mxu0
    %v215 = vadd.f32 0.0, %v214
    %v216 = vpop.f32.mrb[0].mxu0
    %217 = vmatprep.mubr.f32.mxu0 0.0
    %218 = vmatmul.mubr.f32.gmra.mrb[0].mxu0 %v101
    %v219 = vpop.f32.mrb[0].mxu0
    %v220 = vadd.f32 0.0, %v219
    %v221 = vpop.f32.mrb[0].mxu0
    %222 = vdwg.mxu0
    %223 = vst [vmem:[#allocation3] sm:$0xff] %v185
    %224 = vst [vmem:[#allocation3 + $0x8] sm:$0xff] %v190
    %225 = vst [vmem:[#allocation3 + $0x10] sm:$0xff] %v195
    %226 = vst [vmem:[#allocation3 + $0x18] sm:$0xff] %v200
    %227 = vst [vmem:[#allocation3 + $0x20] sm:$0xff] %v205
    %228 = vst [vmem:[#allocation3 + $0x28] sm:$0xff] %v210
    %229 = vst [vmem:[#allocation3 + $0x30] sm:$0xff] %v215
    %230 = vst [vmem:[#allocation3 + $0x38] sm:$0xff] %v220
    %v231 = vld [vmem:[#allocation12] sm:$0x1]
    %v233 = vlaneseq
    %v234 = vshrl.u32 %v233, 7
    %v235 = vsub.s32 0, %v234
    %v236 = vrot.slane %v231, %v235
    %v238 = vld [vmem:[#allocation10] sm:$0xff]
    %v239 = vld [vmem:[#allocation10 + $0x8] sm:$0xff]
    %v240 = vld [vmem:[#allocation10 + $0x10] sm:$0xff]
    %v241 = vld [vmem:[#allocation10 + $0x18] sm:$0xff]
    %v242 = vld [vmem:[#allocation10 + $0x20] sm:$0xff]
    %v243 = vld [vmem:[#allocation10 + $0x28] sm:$0xff]
    %v244 = vld [vmem:[#allocation10 + $0x30] sm:$0xff]
    %v245 = vld [vmem:[#allocation10 + $0x38] sm:$0xff]
    %v246 = vld [vmem:[#allocation10 + $0x40] sm:$0xff]
    %v247 = vld [vmem:[#allocation10 + $0x48] sm:$0xff]
    %v248 = vld [vmem:[#allocation10 + $0x50] sm:$0xff]
    %v249 = vld [vmem:[#allocation10 + $0x58] sm:$0xff]
    %v250 = vld [vmem:[#allocation10 + $0x60] sm:$0xff]
    %v251 = vld [vmem:[#allocation10 + $0x68] sm:$0xff]
    %v252 = vld [vmem:[#allocation10 + $0x70] sm:$0xff]
    %v253 = vld [vmem:[#allocation10 + $0x78] sm:$0xff]
    %v254 = vld [vmem:[#allocation2] sm:$0xff]
    %255 = vmatprep.subr.mxu0 0.0
    %256 = vmatpush1.msra.mxu0 %v238
    %257 = vmatprep.subr.mxu0 0.0
    %258 = vmatpush1.msra.mxu0 %v239
    %259 = vmatprep.subr.mxu0 0.0
    %260 = vmatpush1.msra.mxu0 %v240
    %261 = vmatprep.subr.mxu0 0.0
    %262 = vmatpush1.msra.mxu0 %v241
    %263 = vmatprep.subr.mxu0 0.0
    %264 = vmatpush1.msra.mxu0 %v242
    %265 = vmatprep.subr.mxu0 0.0
    %266 = vmatpush1.msra.mxu0 %v243
    %267 = vmatprep.subr.mxu0 0.0
    %268 = vmatpush1.msra.mxu0 %v244
    %269 = vmatprep.subr.mxu0 0.0
    %270 = vmatpush1.msra.mxu0 %v245
    %271 = vmatprep.subr.mxu0 0.0
    %272 = vmatpush1.msra.mxu0 %v246
    %273 = vmatprep.subr.mxu0 0.0
    %274 = vmatpush1.msra.mxu0 %v247
    %275 = vmatprep.subr.mxu0 0.0
    %276 = vmatpush1.msra.mxu0 %v248
    %277 = vmatprep.subr.mxu0 0.0
    %278 = vmatpush1.msra.mxu0 %v249
    %279 = vmatprep.subr.mxu0 0.0
    %280 = vmatpush1.msra.mxu0 %v250
    %281 = vmatprep.subr.mxu0 0.0
    %282 = vmatpush1.msra.mxu0 %v251
    %283 = vmatprep.subr.mxu0 0.0
    %284 = vmatpush1.msra.mxu0 %v252
    %285 = vmatprep.subr.mxu0 0.0
    %286 = vmatpush1.msra.mxu0 %v253
    %287 = vmatprep.subr.mxu0 0.0
    %288 = vmatpush1.msra.mxu0 0.0
    %289 = vmatprep.subr.mxu0 0.0
    %290 = vmatpush1.msra.mxu0 0.0
    %291 = vmatprep.subr.mxu0 0.0
    %292 = vmatpush1.msra.mxu0 0.0
    %293 = vmatprep.subr.mxu0 0.0
    %294 = vmatpush1.msra.mxu0 0.0
    %295 = vmatprep.subr.mxu0 0.0
    %296 = vmatpush1.msra.mxu0 0.0
    %297 = vmatprep.subr.mxu0 0.0
    %298 = vmatpush1.msra.mxu0 0.0
    %299 = vmatprep.subr.mxu0 0.0
    %300 = vmatpush1.msra.mxu0 0.0
    %301 = vmatprep.subr.mxu0 0.0
    %302 = vmatpush1.msra.mxu0 0.0
    %303 = vmatprep.subr.mxu0 0.0
    %304 = vmatpush1.msra.mxu0 0.0
    %305 = vmatprep.subr.mxu0 0.0
    %306 = vmatpush1.msra.mxu0 0.0
    %307 = vmatprep.subr.mxu0 0.0
    %308 = vmatpush1.msra.mxu0 0.0
    %309 = vmatprep.subr.mxu0 0.0
    %310 = vmatpush1.msra.mxu0 0.0
    %311 = vmatprep.subr.mxu0 0.0
    %312 = vmatpush1.msra.mxu0 0.0
    %313 = vmatprep.subr.mxu0 0.0
    %314 = vmatpush1.msra.mxu0 0.0
    %315 = vmatprep.subr.mxu0 0.0
    %316 = vmatpush1.msra.mxu0 0.0
    %317 = vmatprep.subr.mxu0 0.0
    %318 = vmatpush1.msra.mxu0 0.0
    %319 = vmatprep.mubr.f32.mxu0 0.0
    %320 = vmatmul.mubr.f32.gmra.mrb[0].mxu0 %v254
    %v321 = vpop.f32.mrb[0].mxu0
    %v322 = vadd.f32 0.0, %v321
    %v323 = vpop.f32.mrb[0].mxu0
    %324 = vdwg.mxu0
    %v325 = vld [vmem:[#allocation3] sm:$0xff]
    %v326 = vadd.f32 %v325, %v322
    %v327 = vadd.f32 %v326, %v236
    %v328 = vtanh.pop %v327
    %329 = vst [vmem:[#allocation13] sm:$0xff] %v328
    %s330 = smul.u32 0, 8
    %p331 = scmp.lt.s32.totalorder %s330, 8
    %s332 = scalar_select %p331, 1, 0
    %v333 = vstv %s332
    %vm334 = vcmp.eq.s32.totalorder %v333, 1
    %v335 = vsel %vm334, %v328, %v254
    %336 = vmatprep.subr.mxu0 0.0
    %337 = vmatpush1.msra.mxu0 %v238
    %338 = vmatprep.subr.mxu0 0.0
    %339 = vmatpush1.msra.mxu0 %v239
    %340 = vmatprep.subr.mxu0 0.0
    %341 = vmatpush1.msra.mxu0 %v240
    %342 = vmatprep.subr.mxu0 0.0
    %343 = vmatpush1.msra.mxu0 %v241
    %344 = vmatprep.subr.mxu0 0.0
    %345 = vmatpush1.msra.mxu0 %v242
    %346 = vmatprep.subr.mxu0 0.0
    %347 = vmatpush1.msra.mxu0 %v243
    %348 = vmatprep.subr.mxu0 0.0
    %349 = vmatpush1.msra.mxu0 %v244
    %350 = vmatprep.subr.mxu0 0.0
    %351 = vmatpush1.msra.mxu0 %v245
    %352 = vmatprep.subr.mxu0 0.0
    %353 = vmatpush1.msra.mxu0 %v246
    %354 = vmatprep.subr.mxu0 0.0
    %355 = vmatpush1.msra.mxu0 %v247
    %356 = vmatprep.subr.mxu0 0.0
    %357 = vmatpush1.msra.mxu0 %v248
    %358 = vmatprep.subr.mxu0 0.0
    %359 = vmatpush1.msra.mxu0 %v249
    %360 = vmatprep.subr.mxu0 0.0
    %361 = vmatpush1.msra.mxu0 %v250
    %362 = vmatprep.subr.mxu0 0.0
    %363 = vmatpush1.msra.mxu0 %v251
    %364 = vmatprep.subr.mxu0 0.0
    %365 = vmatpush1.msra.mxu0 %v252
    %366 = vmatprep.subr.mxu0 0.0
    %367 = vmatpush1.msra.mxu0 %v253
    %368 = vmatprep.subr.mxu0 0.0
    %369 = vmatpush1.msra.mxu0 0.0
    %370 = vmatprep.subr.mxu0 0.0
    %371 = vmatpush1.msra.mxu0 0.0
    %372 = vmatprep.subr.mxu0 0.0
    %373 = vmatpush1.msra.mxu0 0.0
    %374 = vmatprep.subr.mxu0 0.0
    %375 = vmatpush1.msra.mxu0 0.0
    %376 = vmatprep.subr.mxu0 0.0
    %377 = vmatpush1.msra.mxu0 0.0
    %378 = vmatprep.subr.mxu0 0.0
    %379 = vmatpush1.msra.mxu0 0.0
    %380 = vmatprep.subr.mxu0 0.0
    %381 = vmatpush1.msra.mxu0 0.0
    %382 = vmatprep.subr.mxu0 0.0
    %383 = vmatpush1.msra.mxu0 0.0
    %384 = vmatprep.subr.mxu0 0.0
    %385 = vmatpush1.msra.mxu0 0.0
    %386 = vmatprep.subr.mxu0 0.0
    %387 = vmatpush1.msra.mxu0 0.0
    %388 = vmatprep.subr.mxu0 0.0
    %389 = vmatpush1.msra.mxu0 0.0
    %390 = vmatprep.subr.mxu0 0.0
    %391 = vmatpush1.msra.mxu0 0.0
    %392 = vmatprep.subr.mxu0 0.0
    %393 = vmatpush1.msra.mxu0 0.0
    %394 = vmatprep.subr.mxu0 0.0
    %395 = vmatpush1.msra.mxu0 0.0
    %396 = vmatprep.subr.mxu0 0.0
    %397 = vmatpush1.msra.mxu0 0.0
    %398 = vmatprep.subr.mxu0 0.0
    %399 = vmatpush1.msra.mxu0 0.0
    %400 = vmatprep.mubr.f32.mxu0 0.0
    %401 = vmatmul.mubr.f32.gmra.mrb[0].mxu0 %v335
    %v402 = vpop.f32.mrb[0].mxu0
    %v403 = vadd.f32 0.0, %v402
    %v404 = vpop.f32.mrb[0].mxu0
    %405 = vdwg.mxu0
    %s406 = scalar_lea.vmem [#allocation3], 8
    %v407 = vld [vmem:[%s406] sm:$0xff]
    %v408 = vadd.f32 %v407, %v403
    %v409 = vadd.f32 %v408, %v236
    %v410 = vtanh.pop %v409
    %s411 = scalar_lea.vmem [#allocation13], 8
    %412 = vst [vmem:[%s411] sm:$0xff] %v410
    %s413 = sadd.s32 %s330, 1
    %p414 = scmp.lt.s32.totalorder %s413, 8
    %s415 = scalar_select %p414, 1, 0
    %v416 = vstv %s415
    %vm417 = vcmp.eq.s32.totalorder %v416, 1
    %v418 = vsel %vm417, %v410, %v335
    %419 = vmatprep.subr.mxu0 0.0
    %420 = vmatpush1.msra.mxu0 %v238
    %421 = vmatprep.subr.mxu0 0.0
    %422 = vmatpush1.msra.mxu0 %v239
    %423 = vmatprep.subr.mxu0 0.0
    %424 = vmatpush1.msra.mxu0 %v240
    %425 = vmatprep.subr.mxu0 0.0
    %426 = vmatpush1.msra.mxu0 %v241
    %427 = vmatprep.subr.mxu0 0.0
    %428 = vmatpush1.msra.mxu0 %v242
    %429 = vmatprep.subr.mxu0 0.0
    %430 = vmatpush1.msra.mxu0 %v243
    %431 = vmatprep.subr.mxu0 0.0
    %432 = vmatpush1.msra.mxu0 %v244
    %433 = vmatprep.subr.mxu0 0.0
    %434 = vmatpush1.msra.mxu0 %v245
    %435 = vmatprep.subr.mxu0 0.0
    %436 = vmatpush1.msra.mxu0 %v246
    %437 = vmatprep.subr.mxu0 0.0
    %438 = vmatpush1.msra.mxu0 %v247
    %439 = vmatprep.subr.mxu0 0.0
    %440 = vmatpush1.msra.mxu0 %v248
    %441 = vmatprep.subr.mxu0 0.0
    %442 = vmatpush1.msra.mxu0 %v249
    %443 = vmatprep.subr.mxu0 0.0
    %444 = vmatpush1.msra.mxu0 %v250
    %445 = vmatprep.subr.mxu0 0.0
    %446 = vmatpush1.msra.mxu0 %v251
    %447 = vmatprep.subr.mxu0 0.0
    %448 = vmatpush1.msra.mxu0 %v252
    %449 = vmatprep.subr.mxu0 0.0
    %450 = vmatpush1.msra.mxu0 %v253
    %451 = vmatprep.subr.mxu0 0.0
    %452 = vmatpush1.msra.mxu0 0.0
    %453 = vmatprep.subr.mxu0 0.0
    %454 = vmatpush1.msra.mxu0 0.0
    %455 = vmatprep.subr.mxu0 0.0
    %456 = vmatpush1.msra.mxu0 0.0
    %457 = vmatprep.subr.mxu0 0.0
    %458 = vmatpush1.msra.mxu0 0.0
    %459 = vmatprep.subr.mxu0 0.0
    %460 = vmatpush1.msra.mxu0 0.0
    %461 = vmatprep.subr.mxu0 0.0
    %462 = vmatpush1.msra.mxu0 0.0
    %463 = vmatprep.subr.mxu0 0.0
    %464 = vmatpush1.msra.mxu0 0.0
    %465 = vmatprep.subr.mxu0 0.0
    %466 = vmatpush1.msra.mxu0 0.0
    %467 = vmatprep.subr.mxu0 0.0
    %468 = vmatpush1.msra.mxu0 0.0
    %469 = vmatprep.subr.mxu0 0.0
    %470 = vmatpush1.msra.mxu0 0.0
    %471 = vmatprep.subr.mxu0 0.0
    %472 = vmatpush1.msra.mxu0 0.0
    %473 = vmatprep.subr.mxu0 0.0
    %474 = vmatpush1.msra.mxu0 0.0
    %475 = vmatprep.subr.mxu0 0.0
    %476 = vmatpush1.msra.mxu0 0.0
    %477 = vmatprep.subr.mxu0 0.0
    %478 = vmatpush1.msra.mxu0 0.0
    %479 = vmatprep.subr.mxu0 0.0
    %480 = vmatpush1.msra.mxu0 0.0
    %481 = vmatprep.subr.mxu0 0.0
    %482 = vmatpush1.msra.mxu0 0.0
    %483 = vmatprep.mubr.f32.mxu0 0.0
    %484 = vmatmul.mubr.f32.gmra.mrb[0].mxu0 %v418
    %v485 = vpop.f32.mrb[0].mxu0
    %v486 = vadd.f32 0.0, %v485
    %v487 = vpop.f32.mrb[0].mxu0
    %488 = vdwg.mxu0
    %s489 = scalar_lea.vmem [#allocation3], 16
    %v490 = vld [vmem:[%s489] sm:$0xff]
    %v491 = vadd.f32 %v490, %v486
    %v492 = vadd.f32 %v491, %v236
    %v493 = vtanh.pop %v492
    %s494 = scalar_lea.vmem [#allocation13], 16
    %495 = vst [vmem:[%s494] sm:$0xff] %v493
    %s496 = sadd.s32 %s330, 2
    %p497 = scmp.lt.s32.totalorder %s496, 8
    %s498 = scalar_select %p497, 1, 0
    %v499 = vstv %s498
    %vm500 = vcmp.eq.s32.totalorder %v499, 1
    %v501 = vsel %vm500, %v493, %v418
    %502 = vmatprep.subr.mxu0 0.0
    %503 = vmatpush1.msra.mxu0 %v238
    %504 = vmatprep.subr.mxu0 0.0
    %505 = vmatpush1.msra.mxu0 %v239
    %506 = vmatprep.subr.mxu0 0.0
    %507 = vmatpush1.msra.mxu0 %v240
    %508 = vmatprep.subr.mxu0 0.0
    %509 = vmatpush1.msra.mxu0 %v241
    %510 = vmatprep.subr.mxu0 0.0
    %511 = vmatpush1.msra.mxu0 %v242
    %512 = vmatprep.subr.mxu0 0.0
    %513 = vmatpush1.msra.mxu0 %v243
    %514 = vmatprep.subr.mxu0 0.0
    %515 = vmatpush1.msra.mxu0 %v244
    %516 = vmatprep.subr.mxu0 0.0
    %517 = vmatpush1.msra.mxu0 %v245
    %518 = vmatprep.subr.mxu0 0.0
    %519 = vmatpush1.msra.mxu0 %v246
    %520 = vmatprep.subr.mxu0 0.0
    %521 = vmatpush1.msra.mxu0 %v247
    %522 = vmatprep.subr.mxu0 0.0
    %523 = vmatpush1.msra.mxu0 %v248
    %524 = vmatprep.subr.mxu0 0.0
    %525 = vmatpush1.msra.mxu0 %v249
    %526 = vmatprep.subr.mxu0 0.0
    %527 = vmatpush1.msra.mxu0 %v250
    %528 = vmatprep.subr.mxu0 0.0
    %529 = vmatpush1.msra.mxu0 %v251
    %530 = vmatprep.subr.mxu0 0.0
    %531 = vmatpush1.msra.mxu0 %v252
    %532 = vmatprep.subr.mxu0 0.0
    %533 = vmatpush1.msra.mxu0 %v253
    %534 = vmatprep.subr.mxu0 0.0
    %535 = vmatpush1.msra.mxu0 0.0
    %536 = vmatprep.subr.mxu0 0.0
    %537 = vmatpush1.msra.mxu0 0.0
    %538 = vmatprep.subr.mxu0 0.0
    %539 = vmatpush1.msra.mxu0 0.0
    %540 = vmatprep.subr.mxu0 0.0
    %541 = vmatpush1.msra.mxu0 0.0
    %542 = vmatprep.subr.mxu0 0.0
    %543 = vmatpush1.msra.mxu0 0.0
    %544 = vmatprep.subr.mxu0 0.0
    %545 = vmatpush1.msra.mxu0 0.0
    %546 = vmatprep.subr.mxu0 0.0
    %547 = vmatpush1.msra.mxu0 0.0
    %548 = vmatprep.subr.mxu0 0.0
    %549 = vmatpush1.msra.mxu0 0.0
    %550 = vmatprep.subr.mxu0 0.0
    %551 = vmatpush1.msra.mxu0 0.0
    %552 = vmatprep.subr.mxu0 0.0
    %553 = vmatpush1.msra.mxu0 0.0
    %554 = vmatprep.subr.mxu0 0.0
    %555 = vmatpush1.msra.mxu0 0.0
    %556 = vmatprep.subr.mxu0 0.0
    %557 = vmatpush1.msra.mxu0 0.0
    %558 = vmatprep.subr.mxu0 0.0
    %559 = vmatpush1.msra.mxu0 0.0
    %560 = vmatprep.subr.mxu0 0.0
    %561 = vmatpush1.msra.mxu0 0.0
    %562 = vmatprep.subr.mxu0 0.0
    %563 = vmatpush1.msra.mxu0 0.0
    %564 = vmatprep.subr.mxu0 0.0
    %565 = vmatpush1.msra.mxu0 0.0
    %566 = vmatprep.mubr.f32.mxu0 0.0
    %567 = vmatmul.mubr.f32.gmra.mrb[0].mxu0 %v501
    %v568 = vpop.f32.mrb[0].mxu0
    %v569 = vadd.f32 0.0, %v568
    %v570 = vpop.f32.mrb[0].mxu0
    %571 = vdwg.mxu0
    %s572 = scalar_lea.vmem [#allocation3], 24
    %v573 = vld [vmem:[%s572] sm:$0xff]
    %v574 = vadd.f32 %v573, %v569
    %v575 = vadd.f32 %v574, %v236
    %v576 = vtanh.pop %v575
    %s577 = scalar_lea.vmem [#allocation13], 24
    %578 = vst [vmem:[%s577] sm:$0xff] %v576
    %s579 = sadd.s32 %s330, 3
    %p580 = scmp.lt.s32.totalorder %s579, 8
    %s581 = scalar_select %p580, 1, 0
    %v582 = vstv %s581
    %vm583 = vcmp.eq.s32.totalorder %v582, 1
    %v584 = vsel %vm583, %v576, %v501
    %585 = vmatprep.subr.mxu0 0.0
    %586 = vmatpush1.msra.mxu0 %v238
    %587 = vmatprep.subr.mxu0 0.0
    %588 = vmatpush1.msra.mxu0 %v239
    %589 = vmatprep.subr.mxu0 0.0
    %590 = vmatpush1.msra.mxu0 %v240
    %591 = vmatprep.subr.mxu0 0.0
    %592 = vmatpush1.msra.mxu0 %v241
    %593 = vmatprep.subr.mxu0 0.0
    %594 = vmatpush1.msra.mxu0 %v242
    %595 = vmatprep.subr.mxu0 0.0
    %596 = vmatpush1.msra.mxu0 %v243
    %597 = vmatprep.subr.mxu0 0.0
    %598 = vmatpush1.msra.mxu0 %v244
    %599 = vmatprep.subr.mxu0 0.0
    %600 = vmatpush1.msra.mxu0 %v245
    %601 = vmatprep.subr.mxu0 0.0
    %602 = vmatpush1.msra.mxu0 %v246
    %603 = vmatprep.subr.mxu0 0.0
    %604 = vmatpush1.msra.mxu0 %v247
    %605 = vmatprep.subr.mxu0 0.0
    %606 = vmatpush1.msra.mxu0 %v248
    %607 = vmatprep.subr.mxu0 0.0
    %608 = vmatpush1.msra.mxu0 %v249
    %609 = vmatprep.subr.mxu0 0.0
    %610 = vmatpush1.msra.mxu0 %v250
    %611 = vmatprep.subr.mxu0 0.0
    %612 = vmatpush1.msra.mxu0 %v251
    %613 = vmatprep.subr.mxu0 0.0
    %614 = vmatpush1.msra.mxu0 %v252
    %615 = vmatprep.subr.mxu0 0.0
    %616 = vmatpush1.msra.mxu0 %v253
    %617 = vmatprep.subr.mxu0 0.0
    %618 = vmatpush1.msra.mxu0 0.0
    %619 = vmatprep.subr.mxu0 0.0
    %620 = vmatpush1.msra.mxu0 0.0
    %621 = vmatprep.subr.mxu0 0.0
    %622 = vmatpush1.msra.mxu0 0.0
    %623 = vmatprep.subr.mxu0 0.0
    %624 = vmatpush1.msra.mxu0 0.0
    %625 = vmatprep.subr.mxu0 0.0
    %626 = vmatpush1.msra.mxu0 0.0
    %627 = vmatprep.subr.mxu0 0.0
    %628 = vmatpush1.msra.mxu0 0.0
    %629 = vmatprep.subr.mxu0 0.0
    %630 = vmatpush1.msra.mxu0 0.0
    %631 = vmatprep.subr.mxu0 0.0
    %632 = vmatpush1.msra.mxu0 0.0
    %633 = vmatprep.subr.mxu0 0.0
    %634 = vmatpush1.msra.mxu0 0.0
    %635 = vmatprep.subr.mxu0 0.0
    %636 = vmatpush1.msra.mxu0 0.0
    %637 = vmatprep.subr.mxu0 0.0
    %638 = vmatpush1.msra.mxu0 0.0
    %639 = vmatprep.subr.mxu0 0.0
    %640 = vmatpush1.msra.mxu0 0.0
    %641 = vmatprep.subr.mxu0 0.0
    %642 = vmatpush1.msra.mxu0 0.0
    %643 = vmatprep.subr.mxu0 0.0
    %644 = vmatpush1.msra.mxu0 0.0
    %645 = vmatprep.subr.mxu0 0.0
    %646 = vmatpush1.msra.mxu0 0.0
    %647 = vmatprep.subr.mxu0 0.0
    %648 = vmatpush1.msra.mxu0 0.0
    %649 = vmatprep.mubr.f32.mxu0 0.0
    %650 = vmatmul.mubr.f32.gmra.mrb[0].mxu0 %v584
    %v651 = vpop.f32.mrb[0].mxu0
    %v652 = vadd.f32 0.0, %v651
    %v653 = vpop.f32.mrb[0].mxu0
    %654 = vdwg.mxu0
    %s655 = scalar_lea.vmem [#allocation3], 32
    %v656 = vld [vmem:[%s655] sm:$0xff]
    %v657 = vadd.f32 %v656, %v652
    %v658 = vadd.f32 %v657, %v236
    %v659 = vtanh.pop %v658
    %s660 = scalar_lea.vmem [#allocation13], 32
    %661 = vst [vmem:[%s660] sm:$0xff] %v659
    %s662 = sadd.s32 %s330, 4
    %p663 = scmp.lt.s32.totalorder %s662, 8
    %s664 = scalar_select %p663, 1, 0
    %v665 = vstv %s664
    %vm666 = vcmp.eq.s32.totalorder %v665, 1
    %v667 = vsel %vm666, %v659, %v584
    %668 = vmatprep.subr.mxu0 0.0
    %669 = vmatpush1.msra.mxu0 %v238
    %670 = vmatprep.subr.mxu0 0.0
    %671 = vmatpush1.msra.mxu0 %v239
    %672 = vmatprep.subr.mxu0 0.0
    %673 = vmatpush1.msra.mxu0 %v240
    %674 = vmatprep.subr.mxu0 0.0
    %675 = vmatpush1.msra.mxu0 %v241
    %676 = vmatprep.subr.mxu0 0.0
    %677 = vmatpush1.msra.mxu0 %v242
    %678 = vmatprep.subr.mxu0 0.0
    %679 = vmatpush1.msra.mxu0 %v243
    %680 = vmatprep.subr.mxu0 0.0
    %681 = vmatpush1.msra.mxu0 %v244
    %682 = vmatprep.subr.mxu0 0.0
    %683 = vmatpush1.msra.mxu0 %v245
    %684 = vmatprep.subr.mxu0 0.0
    %685 = vmatpush1.msra.mxu0 %v246
    %686 = vmatprep.subr.mxu0 0.0
    %687 = vmatpush1.msra.mxu0 %v247
    %688 = vmatprep.subr.mxu0 0.0
    %689 = vmatpush1.msra.mxu0 %v248
    %690 = vmatprep.subr.mxu0 0.0
    %691 = vmatpush1.msra.mxu0 %v249
    %692 = vmatprep.subr.mxu0 0.0
    %693 = vmatpush1.msra.mxu0 %v250
    %694 = vmatprep.subr.mxu0 0.0
    %695 = vmatpush1.msra.mxu0 %v251
    %696 = vmatprep.subr.mxu0 0.0
    %697 = vmatpush1.msra.mxu0 %v252
    %698 = vmatprep.subr.mxu0 0.0
    %699 = vmatpush1.msra.mxu0 %v253
    %700 = vmatprep.subr.mxu0 0.0
    %701 = vmatpush1.msra.mxu0 0.0
    %702 = vmatprep.subr.mxu0 0.0
    %703 = vmatpush1.msra.mxu0 0.0
    %704 = vmatprep.subr.mxu0 0.0
    %705 = vmatpush1.msra.mxu0 0.0
    %706 = vmatprep.subr.mxu0 0.0
    %707 = vmatpush1.msra.mxu0 0.0
    %708 = vmatprep.subr.mxu0 0.0
    %709 = vmatpush1.msra.mxu0 0.0
    %710 = vmatprep.subr.mxu0 0.0
    %711 = vmatpush1.msra.mxu0 0.0
    %712 = vmatprep.subr.mxu0 0.0
    %713 = vmatpush1.msra.mxu0 0.0
    %714 = vmatprep.subr.mxu0 0.0
    %715 = vmatpush1.msra.mxu0 0.0
    %716 = vmatprep.subr.mxu0 0.0
    %717 = vmatpush1.msra.mxu0 0.0
    %718 = vmatprep.subr.mxu0 0.0
    %719 = vmatpush1.msra.mxu0 0.0
    %720 = vmatprep.subr.mxu0 0.0
    %721 = vmatpush1.msra.mxu0 0.0
    %722 = vmatprep.subr.mxu0 0.0
    %723 = vmatpush1.msra.mxu0 0.0
    %724 = vmatprep.subr.mxu0 0.0
    %725 = vmatpush1.msra.mxu0 0.0
    %726 = vmatprep.subr.mxu0 0.0
    %727 = vmatpush1.msra.mxu0 0.0
    %728 = vmatprep.subr.mxu0 0.0
    %729 = vmatpush1.msra.mxu0 0.0
    %730 = vmatprep.subr.mxu0 0.0
    %731 = vmatpush1.msra.mxu0 0.0
    %732 = vmatprep.mubr.f32.mxu0 0.0
    %733 = vmatmul.mubr.f32.gmra.mrb[0].mxu0 %v667
    %v734 = vpop.f32.mrb[0].mxu0
    %v735 = vadd.f32 0.0, %v734
    %v736 = vpop.f32.mrb[0].mxu0
    %737 = vdwg.mxu0
    %s738 = scalar_lea.vmem [#allocation3], 40
    %v739 = vld [vmem:[%s738] sm:$0xff]
    %v740 = vadd.f32 %v739, %v735
    %v741 = vadd.f32 %v740, %v236
    %v742 = vtanh.pop %v741
    %s743 = scalar_lea.vmem [#allocation13], 40
    %744 = vst [vmem:[%s743] sm:$0xff] %v742
    %s745 = sadd.s32 %s330, 5
    %p746 = scmp.lt.s32.totalorder %s745, 8
    %s747 = scalar_select %p746, 1, 0
    %v748 = vstv %s747
    %vm749 = vcmp.eq.s32.totalorder %v748, 1
    %v750 = vsel %vm749, %v742, %v667
    %751 = vmatprep.subr.mxu0 0.0
    %752 = vmatpush1.msra.mxu0 %v238
    %753 = vmatprep.subr.mxu0 0.0
    %754 = vmatpush1.msra.mxu0 %v239
    %755 = vmatprep.subr.mxu0 0.0
    %756 = vmatpush1.msra.mxu0 %v240
    %757 = vmatprep.subr.mxu0 0.0
    %758 = vmatpush1.msra.mxu0 %v241
    %759 = vmatprep.subr.mxu0 0.0
    %760 = vmatpush1.msra.mxu0 %v242
    %761 = vmatprep.subr.mxu0 0.0
    %762 = vmatpush1.msra.mxu0 %v243
    %763 = vmatprep.subr.mxu0 0.0
    %764 = vmatpush1.msra.mxu0 %v244
    %765 = vmatprep.subr.mxu0 0.0
    %766 = vmatpush1.msra.mxu0 %v245
    %767 = vmatprep.subr.mxu0 0.0
    %768 = vmatpush1.msra.mxu0 %v246
    %769 = vmatprep.subr.mxu0 0.0
    %770 = vmatpush1.msra.mxu0 %v247
    %771 = vmatprep.subr.mxu0 0.0
    %772 = vmatpush1.msra.mxu0 %v248
    %773 = vmatprep.subr.mxu0 0.0
    %774 = vmatpush1.msra.mxu0 %v249
    %775 = vmatprep.subr.mxu0 0.0
    %776 = vmatpush1.msra.mxu0 %v250
    %777 = vmatprep.subr.mxu0 0.0
    %778 = vmatpush1.msra.mxu0 %v251
    %779 = vmatprep.subr.mxu0 0.0
    %780 = vmatpush1.msra.mxu0 %v252
    %781 = vmatprep.subr.mxu0 0.0
    %782 = vmatpush1.msra.mxu0 %v253
    %783 = vmatprep.subr.mxu0 0.0
    %784 = vmatpush1.msra.mxu0 0.0
    %785 = vmatprep.subr.mxu0 0.0
    %786 = vmatpush1.msra.mxu0 0.0
    %787 = vmatprep.subr.mxu0 0.0
    %788 = vmatpush1.msra.mxu0 0.0
    %789 = vmatprep.subr.mxu0 0.0
    %790 = vmatpush1.msra.mxu0 0.0
    %791 = vmatprep.subr.mxu0 0.0
    %792 = vmatpush1.msra.mxu0 0.0
    %793 = vmatprep.subr.mxu0 0.0
    %794 = vmatpush1.msra.mxu0 0.0
    %795 = vmatprep.subr.mxu0 0.0
    %796 = vmatpush1.msra.mxu0 0.0
    %797 = vmatprep.subr.mxu0 0.0
    %798 = vmatpush1.msra.mxu0 0.0
    %799 = vmatprep.subr.mxu0 0.0
    %800 = vmatpush1.msra.mxu0 0.0
    %801 = vmatprep.subr.mxu0 0.0
    %802 = vmatpush1.msra.mxu0 0.0
    %803 = vmatprep.subr.mxu0 0.0
    %804 = vmatpush1.msra.mxu0 0.0
    %805 = vmatprep.subr.mxu0 0.0
    %806 = vmatpush1.msra.mxu0 0.0
    %807 = vmatprep.subr.mxu0 0.0
    %808 = vmatpush1.msra.mxu0 0.0
    %809 = vmatprep.subr.mxu0 0.0
    %810 = vmatpush1.msra.mxu0 0.0
    %811 = vmatprep.subr.mxu0 0.0
    %812 = vmatpush1.msra.mxu0 0.0
    %813 = vmatprep.subr.mxu0 0.0
    %814 = vmatpush1.msra.mxu0 0.0
    %815 = vmatprep.mubr.f32.mxu0 0.0
    %816 = vmatmul.mubr.f32.gmra.mrb[0].mxu0 %v750
    %v817 = vpop.f32.mrb[0].mxu0
    %v818 = vadd.f32 0.0, %v817
    %v819 = vpop.f32.mrb[0].mxu0
    %820 = vdwg.mxu0
    %s821 = scalar_lea.vmem [#allocation3], 48
    %v822 = vld [vmem:[%s821] sm:$0xff]
    %v823 = vadd.f32 %v822, %v818
    %v824 = vadd.f32 %v823, %v236
    %v825 = vtanh.pop %v824
    %s826 = scalar_lea.vmem [#allocation13], 48
    %827 = vst [vmem:[%s826] sm:$0xff] %v825
    %s828 = sadd.s32 %s330, 6
    %p829 = scmp.lt.s32.totalorder %s828, 8
    %s830 = scalar_select %p829, 1, 0
    %v831 = vstv %s830
    %vm832 = vcmp.eq.s32.totalorder %v831, 1
    %v833 = vsel %vm832, %v825, %v750
    %834 = vmatprep.subr.mxu0 0.0
    %835 = vmatpush1.msra.mxu0 %v238
    %836 = vmatprep.subr.mxu0 0.0
    %837 = vmatpush1.msra.mxu0 %v239
    %838 = vmatprep.subr.mxu0 0.0
    %839 = vmatpush1.msra.mxu0 %v240
    %840 = vmatprep.subr.mxu0 0.0
    %841 = vmatpush1.msra.mxu0 %v241
    %842 = vmatprep.subr.mxu0 0.0
    %843 = vmatpush1.msra.mxu0 %v242
    %844 = vmatprep.subr.mxu0 0.0
    %845 = vmatpush1.msra.mxu0 %v243
    %846 = vmatprep.subr.mxu0 0.0
    %847 = vmatpush1.msra.mxu0 %v244
    %848 = vmatprep.subr.mxu0 0.0
    %849 = vmatpush1.msra.mxu0 %v245
    %850 = vmatprep.subr.mxu0 0.0
    %851 = vmatpush1.msra.mxu0 %v246
    %852 = vmatprep.subr.mxu0 0.0
    %853 = vmatpush1.msra.mxu0 %v247
    %854 = vmatprep.subr.mxu0 0.0
    %855 = vmatpush1.msra.mxu0 %v248
    %856 = vmatprep.subr.mxu0 0.0
    %857 = vmatpush1.msra.mxu0 %v249
    %858 = vmatprep.subr.mxu0 0.0
    %859 = vmatpush1.msra.mxu0 %v250
    %860 = vmatprep.subr.mxu0 0.0
    %861 = vmatpush1.msra.mxu0 %v251
    %862 = vmatprep.subr.mxu0 0.0
    %863 = vmatpush1.msra.mxu0 %v252
    %864 = vmatprep.subr.mxu0 0.0
    %865 = vmatpush1.msra.mxu0 %v253
    %866 = vmatprep.subr.mxu0 0.0
    %867 = vmatpush1.msra.mxu0 0.0
    %868 = vmatprep.subr.mxu0 0.0
    %869 = vmatpush1.msra.mxu0 0.0
    %870 = vmatprep.subr.mxu0 0.0
    %871 = vmatpush1.msra.mxu0 0.0
    %872 = vmatprep.subr.mxu0 0.0
    %873 = vmatpush1.msra.mxu0 0.0
    %874 = vmatprep.subr.mxu0 0.0
    %875 = vmatpush1.msra.mxu0 0.0
    %876 = vmatprep.subr.mxu0 0.0
    %877 = vmatpush1.msra.mxu0 0.0
    %878 = vmatprep.subr.mxu0 0.0
    %879 = vmatpush1.msra.mxu0 0.0
    %880 = vmatprep.subr.mxu0 0.0
    %881 = vmatpush1.msra.mxu0 0.0
    %882 = vmatprep.subr.mxu0 0.0
    %883 = vmatpush1.msra.mxu0 0.0
    %884 = vmatprep.subr.mxu0 0.0
    %885 = vmatpush1.msra.mxu0 0.0
    %886 = vmatprep.subr.mxu0 0.0
    %887 = vmatpush1.msra.mxu0 0.0
    %888 = vmatprep.subr.mxu0 0.0
    %889 = vmatpush1.msra.mxu0 0.0
    %890 = vmatprep.subr.mxu0 0.0
    %891 = vmatpush1.msra.mxu0 0.0
    %892 = vmatprep.subr.mxu0 0.0
    %893 = vmatpush1.msra.mxu0 0.0
    %894 = vmatprep.subr.mxu0 0.0
    %895 = vmatpush1.msra.mxu0 0.0
    %896 = vmatprep.subr.mxu0 0.0
    %897 = vmatpush1.msra.mxu0 0.0
    %898 = vmatprep.mubr.f32.mxu0 0.0
    %899 = vmatmul.mubr.f32.gmra.mrb[0].mxu0 %v833
    %v900 = vpop.f32.mrb[0].mxu0
    %v901 = vadd.f32 0.0, %v900
    %v902 = vpop.f32.mrb[0].mxu0
    %903 = vdwg.mxu0
    %s904 = scalar_lea.vmem [#allocation3], 56
    %v905 = vld [vmem:[%s904] sm:$0xff]
    %v906 = vadd.f32 %v905, %v901
    %v907 = vadd.f32 %v906, %v236
    %v908 = vtanh.pop %v907
    %s909 = scalar_lea.vmem [#allocation13], 56
    %910 = vst [vmem:[%s909] sm:$0xff] %v908
    %s911 = sadd.s32 %s330, 7
    %p912 = scmp.lt.s32.totalorder %s911, 8
    %s913 = scalar_select %p912, 1, 0
    %v914 = vstv %s913
    %vm915 = vcmp.eq.s32.totalorder %v914, 1
    %v916 = vsel %vm915, %v908, %v833
    %917 = vst [vmem:[#allocation2] sm:$0xff] %v916
    // Predicated region
    $region46: #{rnn_forward.2} parent=1 // pred_check
      %p918 = pneg %p88
    $region47: #{rnn_forward.2} parent=1 // pred_check_branch
      %920 = sbr.rel (%p918) target = $region49
    $region48: #{rnn_forward.2} parent=1 // pred_region
      %921 = vst [vmem:[#allocation14] sm:$0xff] %v916
    $region49: #{rnn_forward.2} parent=1 // pred_fallthru
      _
    // Predicated region
    $region50: #{rnn_forward.2} parent=1 // pred_check
      _
    $region51: #{rnn_forward.2} parent=1 // pred_check_branch
      %923 = sbr.rel (0) target = $region53
    $region52: #{rnn_forward.2} parent=1 // pred_region
      %s925 = ssub.s32 1024, 1024
      %926 = vsyncadd [#allocation6], %s925
      %s927 = sshll.u32 [#allocation13], 4
      %s928 = int_to_ptr.vmem [resolvable:$true] %s927
      %933 = dma.vmem_to_hbm [thread:$0]  %s928, 1024, %s5, [#allocation6], 128, 128, 8
    $region53: #{rnn_forward.2} parent=1 // pred_fallthru
      _
    // Predicated region
    $region54: #{rnn_forward.2} parent=1 // pred_check
      _
    $region55: #{rnn_forward.2} parent=1 // pred_check_branch
      %935 = sbr.rel (0) target = $region57
    $region56: #{rnn_forward.2} parent=1 // pred_region
      %s937 = ssub.s32 128, 128
      %938 = vsyncadd [#allocation15], %s937
      %s940 = sshll.u32 [#allocation14], 4
      %s941 = int_to_ptr.vmem [resolvable:$true] %s940
      %943 = dma.vmem_to_hbm [thread:$0]  %s941, 128, %s6, [#allocation15]
    $region57: #{rnn_forward.2} parent=1 // pred_fallthru
      _
    // Predicated region
    $region58: #{rnn_forward.2} parent=1 // pred_check
      _
    $region59: #{rnn_forward.2} parent=1 // pred_check_branch
      %945 = sbr.rel (0) target = $region61
    $region60: #{rnn_forward.2} parent=1 // pred_region
      %946 = dma.done [#allocation6], 1024
    $region61: #{rnn_forward.2} parent=1 // pred_fallthru
      _
    // Predicated region
    $region62: #{rnn_forward.2} parent=1 // pred_check
      _
    $region63: #{rnn_forward.2} parent=1 // pred_check_branch
      %948 = sbr.rel (0) target = $region65
    $region64: #{rnn_forward.2} parent=1 // pred_region
      %949 = dma.done [#allocation15], 128
    $region65: #{rnn_forward.2} parent=1 // pred_fallthru
      _
    %950 = vsyncpa [#allocation5], 1
    %951 = vsyncpa [#allocation8], 1
    %952 = vsyncpa [#allocation11], 1
    %953 = vsyncpa [#allocation6], 1
    %954 = vsyncpa [#allocation15], 1

</llo_original>
